<compile_context>
chip_gen: v7x
topology: tpu7x:2x2x1
jax: 0.10.0
libtpu: 0.0.40
codegen_flags: <defaults>
</compile_context>

<pallas_src>
import numpy as np

import jax
import jax.numpy as jnp
from jax import lax
from jax.experimental import pallas as pl
from jax.experimental.pallas import tpu as pltpu

NEG_SLOPE = 0.01             # nn.LeakyReLU default
BN_EPS = 1e-5                # nn.BatchNorm2d default
MATMUL_DTYPE = jnp.bfloat16  # MXU-native on v6e/v7x; set jnp.float32 for strict f32

# 3x3 taps in (kh, kw) order: tap t = kh*3 + kw, offset (dy, dx) = (kh-1, kw-1).
_TAPS = tuple((dy, dx) for dy in (-1, 0, 1) for dx in (-1, 0, 1))


# ------------------------------ Pallas kernel -------------------------------

def _make_resconv_kernel(H, W):
    HW = H * W
    # Rolling the flattened (C, H*W) tile by -(dy*W + dx) brings x[h+dy, w+dx]
    # to flat position h*W + w; wrap-around is zeroed by the border masks.
    shifts = tuple((-(dy * W + dx)) % HW for dy, dx in _TAPS)

    def kernel(x_ref, mask_ref, w1_ref, b1_ref, w2_ref, b2_ref, w3_ref, b3_ref,
               o_ref, p1_ref, p2_ref, p3_ref):
        # Border masks for the 9 taps, hoisted once (each (1, HW)).
        masks = [mask_ref[t:t + 1, :] for t in range(9)]

        def conv_norm_relu(x_f32, patch_ref, w_ref, b_ref):
            c = x_f32.shape[0]
            # im2col: 9 lane-rolls (XLU) + border mask, staged into a VMEM
            # scratch patch matrix, then a single MXU matmul.
            for t, s in enumerate(shifts):
                shifted = x_f32 if s == 0 else pltpu.roll(x_f32, s, 1)
                patch_ref[t * c:(t + 1) * c, :] = shifted * masks[t]
            patches = patch_ref[...].astype(MATMUL_DTYPE)          # (9C, HW)
            acc = jnp.dot(w_ref[...], patches,
                          preferred_element_type=jnp.float32)       # (Cout, HW) f32
            y = acc + b_ref[...]                                     # folded bias/BN
            return jnp.where(y > 0.0, y, NEG_SLOPE * y)              # LeakyReLU

        x = x_ref[...]
        z = conv_norm_relu(x, p1_ref, w1_ref, b1_ref)   # encode
        m = conv_norm_relu(z, p2_ref, w2_ref, b2_ref)   # sqz
        y = conv_norm_relu(m, p3_ref, w3_ref, b3_ref)   # decode
        o_ref[...] = (y + z).astype(o_ref.dtype)        # fused residual add

    return kernel


# ------------------------------ wrapper glue --------------------------------

def _fold_layer(p):
    """Fold conv bias + eval-mode BN into (scaled OIHW weights, per-channel shift)."""
    scale = p["gamma"] * lax.rsqrt(p["var"] + BN_EPS)                 # (Cout,)
    shift = (p["bias"] - p["mean"]) * scale + p["beta"]               # (Cout,)
    w = p["w"] * scale[:, None, None, None]                           # (Cout,Cin,3,3)
    return w.astype(jnp.float32), shift.astype(jnp.float32)


def _pack_weights(w_oihw):
    """(Cout, Cin, 3, 3) -> (Cout, 9*Cin); column index = (kh*3 + kw)*Cin + cin."""
    co, ci, kh, kw = w_oihw.shape
    return jnp.transpose(w_oihw, (0, 2, 3, 1)).reshape(co, kh * kw * ci).astype(MATMUL_DTYPE)


def _make_tap_masks(H, W):
    """(9, H*W) f32: 1.0 where the tap's source pixel lies inside the image."""
    hh, ww = np.meshgrid(np.arange(H), np.arange(W), indexing="ij")
    rows = []
    for dy, dx in _TAPS:
        valid = (hh + dy >= 0) & (hh + dy < H) & (ww + dx >= 0) & (ww + dx < W)
        rows.append(valid.reshape(-1))
    return jnp.asarray(np.stack(rows).astype(np.float32))


@jax.jit
def res_conv_forward(x_nchw, params):
    """ResConv.forward: z = encode(x); return decode(sqz(z)) + z."""
    N, C_in, H, W = x_nchw.shape
    HW = H * W

    w1, b1 = _fold_layer(params["encode"])
    w2, b2 = _fold_layer(params["sqz"])
    w3, b3 = _fold_layer(params["decode"])
    C_out, C_mid = w1.shape[0], w2.shape[0]

    w1p, w2p, w3p = _pack_weights(w1), _pack_weights(w2), _pack_weights(w3)
    b1c, b2c, b3c = b1.reshape(-1, 1), b2.reshape(-1, 1), b3.reshape(-1, 1)
    masks = _make_tap_masks(H, W)

    # Channels-first, flattened spatial; contiguous reshape (no transpose, no pad).
    x2 = x_nchw.astype(jnp.float32).reshape(N, C_in, HW)

    def _full(a):   # grid-invariant operand (weights / shifts / masks)
        return pl.BlockSpec(a.shape, lambda n: (0,) * a.ndim)

    out2 = pl.pallas_call(
        _make_resconv_kernel(H, W),
        out_shape=jax.ShapeDtypeStruct((N, C_out, HW), jnp.float32),
        grid=(N,),
        in_specs=[
            pl.BlockSpec((None, C_in, HW), lambda n: (n, 0, 0)),
            _full(masks),
            _full(w1p), _full(b1c),
            _full(w2p), _full(b2c),
            _full(w3p), _full(b3c),
        ],
        out_specs=pl.BlockSpec((None, C_out, HW), lambda n: (n, 0, 0)),
        scratch_shapes=[
            pltpu.VMEM((9 * C_in, HW), jnp.float32),    # encode patch matrix
            pltpu.VMEM((9 * C_out, HW), jnp.float32),   # sqz patch matrix
            pltpu.VMEM((9 * C_mid, HW), jnp.float32),   # decode patch matrix
        ],
        # Batch axis stays "parallel": v7x megacore takes one element per TC;
        # no-op on single-TC v5e/v6e.
        compiler_params=pltpu.CompilerParams(
            dimension_semantics=("parallel",)),
    )(x2, masks, w1p, b1c, w2p, b2c, w3p, b3c)

    # TODO(synk): for real image sizes add an H-tile grid axis with a 2-row
    #             halo and set vmem_limit_bytes; full-image blocks are fine at 16x16.
    return out2.reshape(N, C_out, H, W)


# --------------------------- parameter construction -------------------------

def make_layer_params(key, cin, cout):
    ks = jax.random.split(key, 6)
    return {
        "w":     0.1 * jax.random.normal(ks[0], (cout, cin, 3, 3), jnp.float32),  # OIHW
        "bias":  0.1 * jax.random.normal(ks[1], (cout,), jnp.float32),
        "gamma": 0.5 + jax.random.uniform(ks[2], (cout,), jnp.float32),
        "beta":  0.1 * jax.random.normal(ks[3], (cout,), jnp.float32),
        "mean":  0.1 * jax.random.normal(ks[4], (cout,), jnp.float32),
        "var":   0.5 + jax.random.uniform(ks[5], (cout,), jnp.float32),
    }


# ----------------------------- pure-JAX reference ----------------------------

def _ref_conv_norm_relu(x_nchw, w_oihw, shift):
    # Same folded weights / shift and the same MATMUL_DTYPE operand rounding
    # (with f32 accumulation) as the kernel, so the comparison is tight; the
    # fold itself is exact algebra on the eval-mode BN formulation.
    y = lax.conv_general_dilated(
        x_nchw.astype(MATMUL_DTYPE), w_oihw.astype(MATMUL_DTYPE),
        window_strides=(1, 1), padding="SAME",
        dimension_numbers=("NCHW", "OIHW", "NCHW"),
        preferred_element_type=jnp.float32)
    y = y + shift[None, :, None, None]
    return jnp.where(y > 0.0, y, NEG_SLOPE * y)


def res_conv_reference(x_nchw, params):
    x = x_nchw.astype(jnp.float32)
    w1, b1 = _fold_layer(params["encode"])
    w2, b2 = _fold_layer(params["sqz"])
    w3, b3 = _fold_layer(params["decode"])
    z = _ref_conv_norm_relu(x, w1, b1)
    return _ref_conv_norm_relu(_ref_conv_norm_relu(z, w2, b2), w3, b3) + z


# ----------------------------------- main ------------------------------------

if __name__ == "__main__":
    key = jax.random.PRNGKey(0)
    k_x, k_e, k_s, k_d = jax.random.split(key, 4)

    N, C_IN, C_MID, C_OUT, H, W = 2, 4, 8, 16, 16, 16

    x = jax.random.normal(k_x, (N, C_IN, H, W), jnp.float32)   # NCHW like PyTorch

    params = {
        "encode": make_layer_params(k_e, C_IN, C_OUT),
        "sqz":    make_layer_params(k_s, C_OUT, C_MID),
        "decode": make_layer_params(k_d, C_MID, C_OUT),
    }

    out = jax.block_until_ready(res_conv_forward(x, params))
    ref = jax.block_until_ready(res_conv_reference(x, params))

    assert out.shape == (N, C_OUT, H, W), out.shape
    assert jnp.allclose(out, ref, rtol=1e-2, atol=1e-2), (
        float(jnp.max(jnp.abs(out - ref))))

    print("KERNEL_OK")
</pallas_src>

<mosaic_0001>
module attributes {stable_mosaic.version = 11 : i64} {
  func.func @kernel(%arg0: i32, %arg1: memref<1x4x256xf32, #tpu.memory_space<vmem>>, %arg2: memref<9x256xf32, #tpu.memory_space<vmem>>, %arg3: memref<16x36xbf16, #tpu.memory_space<vmem>>, %arg4: memref<16x1xf32, #tpu.memory_space<vmem>>, %arg5: memref<8x144xbf16, #tpu.memory_space<vmem>>, %arg6: memref<8x1xf32, #tpu.memory_space<vmem>>, %arg7: memref<16x72xbf16, #tpu.memory_space<vmem>>, %arg8: memref<16x1xf32, #tpu.memory_space<vmem>>, %arg9: memref<1x16x256xf32, #tpu.memory_space<vmem>>, %arg10: memref<36x256xf32, #tpu.memory_space<vmem>>, %arg11: memref<144x256xf32, #tpu.memory_space<vmem>>, %arg12: memref<72x256xf32, #tpu.memory_space<vmem>>) attributes {dimension_semantics = [#tpu.dimension_semantics<parallel>], iteration_bounds = array<i64: 2>, scalar_prefetch = 0 : i64, scratch_operands = 3 : i64, tpu.core_type = #tpu.core_type<tc>, window_params = [{transform_indices = @transform_0, window_bounds = array<i64: 1, 4, 256>}, {pipeline_mode = #tpu.pipeline_mode<synchronous>, transform_indices = @transform_1, window_bounds = array<i64: 9, 256>}, {pipeline_mode = #tpu.pipeline_mode<synchronous>, transform_indices = @transform_2, window_bounds = array<i64: 16, 36>}, {pipeline_mode = #tpu.pipeline_mode<synchronous>, transform_indices = @transform_3, window_bounds = array<i64: 16, 1>}, {pipeline_mode = #tpu.pipeline_mode<synchronous>, transform_indices = @transform_4, window_bounds = array<i64: 8, 144>}, {pipeline_mode = #tpu.pipeline_mode<synchronous>, transform_indices = @transform_5, window_bounds = array<i64: 8, 1>}, {pipeline_mode = #tpu.pipeline_mode<synchronous>, transform_indices = @transform_6, window_bounds = array<i64: 16, 72>}, {pipeline_mode = #tpu.pipeline_mode<synchronous>, transform_indices = @transform_7, window_bounds = array<i64: 16, 1>}, {transform_indices = @transform_8, window_bounds = array<i64: 1, 16, 256>}]} {
    %c0 = arith.constant 0 : index
    %c0_0 = arith.constant 0 : index
    %0 = vector.load %arg2[%c0, %c0_0] : memref<9x256xf32, #tpu.memory_space<vmem>>, vector<1x256xf32>
    %c1 = arith.constant 1 : index
    %c0_1 = arith.constant 0 : index
    %1 = vector.load %arg2[%c1, %c0_1] : memref<9x256xf32, #tpu.memory_space<vmem>>, vector<1x256xf32>
    %c2 = arith.constant 2 : index
    %c0_2 = arith.constant 0 : index
    %2 = vector.load %arg2[%c2, %c0_2] : memref<9x256xf32, #tpu.memory_space<vmem>>, vector<1x256xf32>
    %c3 = arith.constant 3 : index
    %c0_3 = arith.constant 0 : index
    %3 = vector.load %arg2[%c3, %c0_3] : memref<9x256xf32, #tpu.memory_space<vmem>>, vector<1x256xf32>
    %c4 = arith.constant 4 : index
    %c0_4 = arith.constant 0 : index
    %4 = vector.load %arg2[%c4, %c0_4] : memref<9x256xf32, #tpu.memory_space<vmem>>, vector<1x256xf32>
    %c5 = arith.constant 5 : index
    %c0_5 = arith.constant 0 : index
    %5 = vector.load %arg2[%c5, %c0_5] : memref<9x256xf32, #tpu.memory_space<vmem>>, vector<1x256xf32>
    %c6 = arith.constant 6 : index
    %c0_6 = arith.constant 0 : index
    %6 = vector.load %arg2[%c6, %c0_6] : memref<9x256xf32, #tpu.memory_space<vmem>>, vector<1x256xf32>
    %c7 = arith.constant 7 : index
    %c0_7 = arith.constant 0 : index
    %7 = vector.load %arg2[%c7, %c0_7] : memref<9x256xf32, #tpu.memory_space<vmem>>, vector<1x256xf32>
    %c8 = arith.constant 8 : index
    %c0_8 = arith.constant 0 : index
    %8 = vector.load %arg2[%c8, %c0_8] : memref<9x256xf32, #tpu.memory_space<vmem>>, vector<1x256xf32>
    %c0_9 = arith.constant 0 : index
    %c0_10 = arith.constant 0 : index
    %c0_11 = arith.constant 0 : index
    %9 = vector.load %arg1[%c0_9, %c0_10, %c0_11] : memref<1x4x256xf32, #tpu.memory_space<vmem>>, vector<1x4x256xf32>
    %10 = vector.shape_cast %9 : vector<1x4x256xf32> to vector<4x256xf32>
    %c17_i32 = arith.constant 17 : i32
    %11 = tpu.dynamic_rotate %10 by %c17_i32 dim 1 : vector<4x256xf32>, i32 -> vector<4x256xf32>
    %12 = vector.broadcast %0 : vector<1x256xf32> to vector<4x256xf32>
    %13 = arith.mulf %11, %12 : vector<4x256xf32>
    %c0_12 = arith.constant 0 : index
    %c0_13 = arith.constant 0 : index
    %14 = vector.load %arg10[%c0_12, %c0_13] : memref<36x256xf32, #tpu.memory_space<vmem>>, vector<4x256xf32>
    tpu.vector_store %arg10[%c0_12, %c0_13], %13 {strides = array<i32>} : memref<36x256xf32, #tpu.memory_space<vmem>>, vector<4x256xf32>,
    %c16_i32 = arith.constant 16 : i32
    %15 = tpu.dynamic_rotate %10 by %c16_i32 dim 1 : vector<4x256xf32>, i32 -> vector<4x256xf32>
    %16 = vector.broadcast %1 : vector<1x256xf32> to vector<4x256xf32>
    %17 = arith.mulf %15, %16 : vector<4x256xf32>
    %c4_14 = arith.constant 4 : index
    %c0_15 = arith.constant 0 : index
    %18 = vector.load %arg10[%c4_14, %c0_15] : memref<36x256xf32, #tpu.memory_space<vmem>>, vector<4x256xf32>
    tpu.vector_store %arg10[%c4_14, %c0_15], %17 {strides = array<i32>} : memref<36x256xf32, #tpu.memory_space<vmem>>, vector<4x256xf32>,
    %c15_i32 = arith.constant 15 : i32
    %19 = tpu.dynamic_rotate %10 by %c15_i32 dim 1 : vector<4x256xf32>, i32 -> vector<4x256xf32>
    %20 = vector.broadcast %2 : vector<1x256xf32> to vector<4x256xf32>
    %21 = arith.mulf %19, %20 : vector<4x256xf32>
    %c8_16 = arith.constant 8 : index
    %c0_17 = arith.constant 0 : index
    %22 = vector.load %arg10[%c8_16, %c0_17] : memref<36x256xf32, #tpu.memory_space<vmem>>, vector<4x256xf32>
    tpu.vector_store %arg10[%c8_16, %c0_17], %21 {strides = array<i32>} : memref<36x256xf32, #tpu.memory_space<vmem>>, vector<4x256xf32>,
    %c1_i32 = arith.constant 1 : i32
    %23 = tpu.dynamic_rotate %10 by %c1_i32 dim 1 : vector<4x256xf32>, i32 -> vector<4x256xf32>
    %24 = vector.broadcast %3 : vector<1x256xf32> to vector<4x256xf32>
    %25 = arith.mulf %23, %24 : vector<4x256xf32>
    %c12 = arith.constant 12 : index
    %c0_18 = arith.constant 0 : index
    %26 = vector.load %arg10[%c12, %c0_18] : memref<36x256xf32, #tpu.memory_space<vmem>>, vector<4x256xf32>
    tpu.vector_store %arg10[%c12, %c0_18], %25 {strides = array<i32>} : memref<36x256xf32, #tpu.memory_space<vmem>>, vector<4x256xf32>,
    %27 = vector.broadcast %4 : vector<1x256xf32> to vector<4x256xf32>
    %28 = arith.mulf %10, %27 : vector<4x256xf32>
    %c16 = arith.constant 16 : index
    %c0_19 = arith.constant 0 : index
    %29 = vector.load %arg10[%c16, %c0_19] : memref<36x256xf32, #tpu.memory_space<vmem>>, vector<4x256xf32>
    tpu.vector_store %arg10[%c16, %c0_19], %28 {strides = array<i32>} : memref<36x256xf32, #tpu.memory_space<vmem>>, vector<4x256xf32>,
    %c255_i32 = arith.constant 255 : i32
    %30 = tpu.dynamic_rotate %10 by %c255_i32 dim 1 : vector<4x256xf32>, i32 -> vector<4x256xf32>
    %31 = vector.broadcast %5 : vector<1x256xf32> to vector<4x256xf32>
    %32 = arith.mulf %30, %31 : vector<4x256xf32>
    %c20 = arith.constant 20 : index
    %c0_20 = arith.constant 0 : index
    %33 = vector.load %arg10[%c20, %c0_20] : memref<36x256xf32, #tpu.memory_space<vmem>>, vector<4x256xf32>
    tpu.vector_store %arg10[%c20, %c0_20], %32 {strides = array<i32>} : memref<36x256xf32, #tpu.memory_space<vmem>>, vector<4x256xf32>,
    %c241_i32 = arith.constant 241 : i32
    %34 = tpu.dynamic_rotate %10 by %c241_i32 dim 1 : vector<4x256xf32>, i32 -> vector<4x256xf32>
    %35 = vector.broadcast %6 : vector<1x256xf32> to vector<4x256xf32>
    %36 = arith.mulf %34, %35 : vector<4x256xf32>
    %c24 = arith.constant 24 : index
    %c0_21 = arith.constant 0 : index
    %37 = vector.load %arg10[%c24, %c0_21] : memref<36x256xf32, #tpu.memory_space<vmem>>, vector<4x256xf32>
    tpu.vector_store %arg10[%c24, %c0_21], %36 {strides = array<i32>} : memref<36x256xf32, #tpu.memory_space<vmem>>, vector<4x256xf32>,
    %c240_i32 = arith.constant 240 : i32
    %38 = tpu.dynamic_rotate %10 by %c240_i32 dim 1 : vector<4x256xf32>, i32 -> vector<4x256xf32>
    %39 = vector.broadcast %7 : vector<1x256xf32> to vector<4x256xf32>
    %40 = arith.mulf %38, %39 : vector<4x256xf32>
    %c28 = arith.constant 28 : index
    %c0_22 = arith.constant 0 : index
    %41 = vector.load %arg10[%c28, %c0_22] : memref<36x256xf32, #tpu.memory_space<vmem>>, vector<4x256xf32>
    tpu.vector_store %arg10[%c28, %c0_22], %40 {strides = array<i32>} : memref<36x256xf32, #tpu.memory_space<vmem>>, vector<4x256xf32>,
    %c239_i32 = arith.constant 239 : i32
    %42 = tpu.dynamic_rotate %10 by %c239_i32 dim 1 : vector<4x256xf32>, i32 -> vector<4x256xf32>
    %43 = vector.broadcast %8 : vector<1x256xf32> to vector<4x256xf32>
    %44 = arith.mulf %42, %43 : vector<4x256xf32>
    %c32 = arith.constant 32 : index
    %c0_23 = arith.constant 0 : index
    %45 = vector.load %arg10[%c32, %c0_23] : memref<36x256xf32, #tpu.memory_space<vmem>>, vector<4x256xf32>
    tpu.vector_store %arg10[%c32, %c0_23], %44 {strides = array<i32>} : memref<36x256xf32, #tpu.memory_space<vmem>>, vector<4x256xf32>,
    %c0_24 = arith.constant 0 : index
    %c0_25 = arith.constant 0 : index
    %46 = vector.load %arg10[%c0_24, %c0_25] : memref<36x256xf32, #tpu.memory_space<vmem>>, vector<36x256xf32>
    %47 = arith.truncf %46 : vector<36x256xf32> to vector<36x256xbf16>
    %c0_26 = arith.constant 0 : index
    %c0_27 = arith.constant 0 : index
    %48 = vector.load %arg3[%c0_26, %c0_27] : memref<16x36xbf16, #tpu.memory_space<vmem>>, vector<16x36xbf16>
    %cst = arith.constant dense<0.000000e+00> : vector<16x256xf32>
    %49 = tpu.matmul %48, %47, %cst {dimension_numbers = #tpu.dot_dimension_numbers<[1], [0], [0], [1], [0, 0, 1, 1], [], []>} : vector<16x36xbf16>, vector<36x256xbf16>, vector<16x256xf32> -> vector<16x256xf32>
    %c0_28 = arith.constant 0 : index
    %c0_29 = arith.constant 0 : index
    %50 = vector.load %arg4[%c0_28, %c0_29] : memref<16x1xf32, #tpu.memory_space<vmem>>, vector<16x1xf32>
    %51 = vector.broadcast %50 : vector<16x1xf32> to vector<16x256xf32>
    %52 = arith.addf %49, %51 : vector<16x256xf32>
    %cst_30 = arith.constant 0.000000e+00 : f32
    %53 = vector.broadcast %cst_30 : f32 to vector<16x256xf32>
    %54 = arith.cmpf ogt, %52, %53 : vector<16x256xf32>
    %cst_31 = arith.constant 0.00999999977 : f32
    %55 = vector.broadcast %cst_31 : f32 to vector<16x256xf32>
    %56 = arith.mulf %55, %52 : vector<16x256xf32>
    %57 = arith.select %54, %52, %56 : vector<16x256xi1>, vector<16x256xf32>
    %c17_i32_32 = arith.constant 17 : i32
    %58 = tpu.dynamic_rotate %57 by %c17_i32_32 dim 1 : vector<16x256xf32>, i32 -> vector<16x256xf32>
    %59 = vector.broadcast %0 : vector<1x256xf32> to vector<16x256xf32>
    %60 = arith.mulf %58, %59 : vector<16x256xf32>
    %c0_33 = arith.constant 0 : index
    %c0_34 = arith.constant 0 : index
    %61 = vector.load %arg11[%c0_33, %c0_34] : memref<144x256xf32, #tpu.memory_space<vmem>>, vector<16x256xf32>
    tpu.vector_store %arg11[%c0_33, %c0_34], %60 {strides = array<i32>} : memref<144x256xf32, #tpu.memory_space<vmem>>, vector<16x256xf32>,
    %c16_i32_35 = arith.constant 16 : i32
    %62 = tpu.dynamic_rotate %57 by %c16_i32_35 dim 1 : vector<16x256xf32>, i32 -> vector<16x256xf32>
    %63 = vector.broadcast %1 : vector<1x256xf32> to vector<16x256xf32>
    %64 = arith.mulf %62, %63 : vector<16x256xf32>
    %c16_36 = arith.constant 16 : index
    %c0_37 = arith.constant 0 : index
    %65 = vector.load %arg11[%c16_36, %c0_37] : memref<144x256xf32, #tpu.memory_space<vmem>>, vector<16x256xf32>
    tpu.vector_store %arg11[%c16_36, %c0_37], %64 {strides = array<i32>} : memref<144x256xf32, #tpu.memory_space<vmem>>, vector<16x256xf32>,
    %c15_i32_38 = arith.constant 15 : i32
    %66 = tpu.dynamic_rotate %57 by %c15_i32_38 dim 1 : vector<16x256xf32>, i32 -> vector<16x256xf32>
    %67 = vector.broadcast %2 : vector<1x256xf32> to vector<16x256xf32>
    %68 = arith.mulf %66, %67 : vector<16x256xf32>
    %c32_39 = arith.constant 32 : index
    %c0_40 = arith.constant 0 : index
    %69 = vector.load %arg11[%c32_39, %c0_40] : memref<144x256xf32, #tpu.memory_space<vmem>>, vector<16x256xf32>
    tpu.vector_store %arg11[%c32_39, %c0_40], %68 {strides = array<i32>} : memref<144x256xf32, #tpu.memory_space<vmem>>, vector<16x256xf32>,
    %c1_i32_41 = arith.constant 1 : i32
    %70 = tpu.dynamic_rotate %57 by %c1_i32_41 dim 1 : vector<16x256xf32>, i32 -> vector<16x256xf32>
    %71 = vector.broadcast %3 : vector<1x256xf32> to vector<16x256xf32>
    %72 = arith.mulf %70, %71 : vector<16x256xf32>
    %c48 = arith.constant 48 : index
    %c0_42 = arith.constant 0 : index
    %73 = vector.load %arg11[%c48, %c0_42] : memref<144x256xf32, #tpu.memory_space<vmem>>, vector<16x256xf32>
    tpu.vector_store %arg11[%c48, %c0_42], %72 {strides = array<i32>} : memref<144x256xf32, #tpu.memory_space<vmem>>, vector<16x256xf32>,
    %74 = vector.broadcast %4 : vector<1x256xf32> to vector<16x256xf32>
    %75 = arith.mulf %57, %74 : vector<16x256xf32>
    %c64 = arith.constant 64 : index
    %c0_43 = arith.constant 0 : index
    %76 = vector.load %arg11[%c64, %c0_43] : memref<144x256xf32, #tpu.memory_space<vmem>>, vector<16x256xf32>
    tpu.vector_store %arg11[%c64, %c0_43], %75 {strides = array<i32>} : memref<144x256xf32, #tpu.memory_space<vmem>>, vector<16x256xf32>,
    %c255_i32_44 = arith.constant 255 : i32
    %77 = tpu.dynamic_rotate %57 by %c255_i32_44 dim 1 : vector<16x256xf32>, i32 -> vector<16x256xf32>
    %78 = vector.broadcast %5 : vector<1x256xf32> to vector<16x256xf32>
    %79 = arith.mulf %77, %78 : vector<16x256xf32>
    %c80 = arith.constant 80 : index
    %c0_45 = arith.constant 0 : index
    %80 = vector.load %arg11[%c80, %c0_45] : memref<144x256xf32, #tpu.memory_space<vmem>>, vector<16x256xf32>
    tpu.vector_store %arg11[%c80, %c0_45], %79 {strides = array<i32>} : memref<144x256xf32, #tpu.memory_space<vmem>>, vector<16x256xf32>,
    %c241_i32_46 = arith.constant 241 : i32
    %81 = tpu.dynamic_rotate %57 by %c241_i32_46 dim 1 : vector<16x256xf32>, i32 -> vector<16x256xf32>
    %82 = vector.broadcast %6 : vector<1x256xf32> to vector<16x256xf32>
    %83 = arith.mulf %81, %82 : vector<16x256xf32>
    %c96 = arith.constant 96 : index
    %c0_47 = arith.constant 0 : index
    %84 = vector.load %arg11[%c96, %c0_47] : memref<144x256xf32, #tpu.memory_space<vmem>>, vector<16x256xf32>
    tpu.vector_store %arg11[%c96, %c0_47], %83 {strides = array<i32>} : memref<144x256xf32, #tpu.memory_space<vmem>>, vector<16x256xf32>,
    %c240_i32_48 = arith.constant 240 : i32
    %85 = tpu.dynamic_rotate %57 by %c240_i32_48 dim 1 : vector<16x256xf32>, i32 -> vector<16x256xf32>
    %86 = vector.broadcast %7 : vector<1x256xf32> to vector<16x256xf32>
    %87 = arith.mulf %85, %86 : vector<16x256xf32>
    %c112 = arith.constant 112 : index
    %c0_49 = arith.constant 0 : index
    %88 = vector.load %arg11[%c112, %c0_49] : memref<144x256xf32, #tpu.memory_space<vmem>>, vector<16x256xf32>
    tpu.vector_store %arg11[%c112, %c0_49], %87 {strides = array<i32>} : memref<144x256xf32, #tpu.memory_space<vmem>>, vector<16x256xf32>,
    %c239_i32_50 = arith.constant 239 : i32
    %89 = tpu.dynamic_rotate %57 by %c239_i32_50 dim 1 : vector<16x256xf32>, i32 -> vector<16x256xf32>
    %90 = vector.broadcast %8 : vector<1x256xf32> to vector<16x256xf32>
    %91 = arith.mulf %89, %90 : vector<16x256xf32>
    %c128 = arith.constant 128 : index
    %c0_51 = arith.constant 0 : index
    %92 = vector.load %arg11[%c128, %c0_51] : memref<144x256xf32, #tpu.memory_space<vmem>>, vector<16x256xf32>
    tpu.vector_store %arg11[%c128, %c0_51], %91 {strides = array<i32>} : memref<144x256xf32, #tpu.memory_space<vmem>>, vector<16x256xf32>,
    %c0_52 = arith.constant 0 : index
    %c0_53 = arith.constant 0 : index
    %93 = vector.load %arg11[%c0_52, %c0_53] : memref<144x256xf32, #tpu.memory_space<vmem>>, vector<144x256xf32>
    %94 = arith.truncf %93 : vector<144x256xf32> to vector<144x256xbf16>
    %c0_54 = arith.constant 0 : index
    %c0_55 = arith.constant 0 : index
    %95 = vector.load %arg5[%c0_54, %c0_55] : memref<8x144xbf16, #tpu.memory_space<vmem>>, vector<8x144xbf16>
    %cst_56 = arith.constant dense<0.000000e+00> : vector<8x256xf32>
    %96 = tpu.matmul %95, %94, %cst_56 {dimension_numbers = #tpu.dot_dimension_numbers<[1], [0], [0], [1], [0, 0, 1, 1], [], []>} : vector<8x144xbf16>, vector<144x256xbf16>, vector<8x256xf32> -> vector<8x256xf32>
    %c0_57 = arith.constant 0 : index
    %c0_58 = arith.constant 0 : index
    %97 = vector.load %arg6[%c0_57, %c0_58] : memref<8x1xf32, #tpu.memory_space<vmem>>, vector<8x1xf32>
    %98 = vector.broadcast %97 : vector<8x1xf32> to vector<8x256xf32>
    %99 = arith.addf %96, %98 : vector<8x256xf32>
    %cst_59 = arith.constant 0.000000e+00 : f32
    %100 = vector.broadcast %cst_59 : f32 to vector<8x256xf32>
    %101 = arith.cmpf ogt, %99, %100 : vector<8x256xf32>
    %cst_60 = arith.constant 0.00999999977 : f32
    %102 = vector.broadcast %cst_60 : f32 to vector<8x256xf32>
    %103 = arith.mulf %102, %99 : vector<8x256xf32>
    %104 = arith.select %101, %99, %103 : vector<8x256xi1>, vector<8x256xf32>
    %c17_i32_61 = arith.constant 17 : i32
    %105 = tpu.dynamic_rotate %104 by %c17_i32_61 dim 1 : vector<8x256xf32>, i32 -> vector<8x256xf32>
    %106 = vector.broadcast %0 : vector<1x256xf32> to vector<8x256xf32>
    %107 = arith.mulf %105, %106 : vector<8x256xf32>
    %c0_62 = arith.constant 0 : index
    %c0_63 = arith.constant 0 : index
    %108 = vector.load %arg12[%c0_62, %c0_63] : memref<72x256xf32, #tpu.memory_space<vmem>>, vector<8x256xf32>
    tpu.vector_store %arg12[%c0_62, %c0_63], %107 {strides = array<i32>} : memref<72x256xf32, #tpu.memory_space<vmem>>, vector<8x256xf32>,
    %c16_i32_64 = arith.constant 16 : i32
    %109 = tpu.dynamic_rotate %104 by %c16_i32_64 dim 1 : vector<8x256xf32>, i32 -> vector<8x256xf32>
    %110 = vector.broadcast %1 : vector<1x256xf32> to vector<8x256xf32>
    %111 = arith.mulf %109, %110 : vector<8x256xf32>
    %c8_65 = arith.constant 8 : index
    %c0_66 = arith.constant 0 : index
    %112 = vector.load %arg12[%c8_65, %c0_66] : memref<72x256xf32, #tpu.memory_space<vmem>>, vector<8x256xf32>
    tpu.vector_store %arg12[%c8_65, %c0_66], %111 {strides = array<i32>} : memref<72x256xf32, #tpu.memory_space<vmem>>, vector<8x256xf32>,
    %c15_i32_67 = arith.constant 15 : i32
    %113 = tpu.dynamic_rotate %104 by %c15_i32_67 dim 1 : vector<8x256xf32>, i32 -> vector<8x256xf32>
    %114 = vector.broadcast %2 : vector<1x256xf32> to vector<8x256xf32>
    %115 = arith.mulf %113, %114 : vector<8x256xf32>
    %c16_68 = arith.constant 16 : index
    %c0_69 = arith.constant 0 : index
    %116 = vector.load %arg12[%c16_68, %c0_69] : memref<72x256xf32, #tpu.memory_space<vmem>>, vector<8x256xf32>
    tpu.vector_store %arg12[%c16_68, %c0_69], %115 {strides = array<i32>} : memref<72x256xf32, #tpu.memory_space<vmem>>, vector<8x256xf32>,
    %c1_i32_70 = arith.constant 1 : i32
    %117 = tpu.dynamic_rotate %104 by %c1_i32_70 dim 1 : vector<8x256xf32>, i32 -> vector<8x256xf32>
    %118 = vector.broadcast %3 : vector<1x256xf32> to vector<8x256xf32>
    %119 = arith.mulf %117, %118 : vector<8x256xf32>
    %c24_71 = arith.constant 24 : index
    %c0_72 = arith.constant 0 : index
    %120 = vector.load %arg12[%c24_71, %c0_72] : memref<72x256xf32, #tpu.memory_space<vmem>>, vector<8x256xf32>
    tpu.vector_store %arg12[%c24_71, %c0_72], %119 {strides = array<i32>} : memref<72x256xf32, #tpu.memory_space<vmem>>, vector<8x256xf32>,
    %121 = vector.broadcast %4 : vector<1x256xf32> to vector<8x256xf32>
    %122 = arith.mulf %104, %121 : vector<8x256xf32>
    %c32_73 = arith.constant 32 : index
    %c0_74 = arith.constant 0 : index
    %123 = vector.load %arg12[%c32_73, %c0_74] : memref<72x256xf32, #tpu.memory_space<vmem>>, vector<8x256xf32>
    tpu.vector_store %arg12[%c32_73, %c0_74], %122 {strides = array<i32>} : memref<72x256xf32, #tpu.memory_space<vmem>>, vector<8x256xf32>,
    %c255_i32_75 = arith.constant 255 : i32
    %124 = tpu.dynamic_rotate %104 by %c255_i32_75 dim 1 : vector<8x256xf32>, i32 -> vector<8x256xf32>
    %125 = vector.broadcast %5 : vector<1x256xf32> to vector<8x256xf32>
    %126 = arith.mulf %124, %125 : vector<8x256xf32>
    %c40 = arith.constant 40 : index
    %c0_76 = arith.constant 0 : index
    %127 = vector.load %arg12[%c40, %c0_76] : memref<72x256xf32, #tpu.memory_space<vmem>>, vector<8x256xf32>
    tpu.vector_store %arg12[%c40, %c0_76], %126 {strides = array<i32>} : memref<72x256xf32, #tpu.memory_space<vmem>>, vector<8x256xf32>,
    %c241_i32_77 = arith.constant 241 : i32
    %128 = tpu.dynamic_rotate %104 by %c241_i32_77 dim 1 : vector<8x256xf32>, i32 -> vector<8x256xf32>
    %129 = vector.broadcast %6 : vector<1x256xf32> to vector<8x256xf32>
    %130 = arith.mulf %128, %129 : vector<8x256xf32>
    %c48_78 = arith.constant 48 : index
    %c0_79 = arith.constant 0 : index
    %131 = vector.load %arg12[%c48_78, %c0_79] : memref<72x256xf32, #tpu.memory_space<vmem>>, vector<8x256xf32>
    tpu.vector_store %arg12[%c48_78, %c0_79], %130 {strides = array<i32>} : memref<72x256xf32, #tpu.memory_space<vmem>>, vector<8x256xf32>,
    %c240_i32_80 = arith.constant 240 : i32
    %132 = tpu.dynamic_rotate %104 by %c240_i32_80 dim 1 : vector<8x256xf32>, i32 -> vector<8x256xf32>
    %133 = vector.broadcast %7 : vector<1x256xf32> to vector<8x256xf32>
    %134 = arith.mulf %132, %133 : vector<8x256xf32>
    %c56 = arith.constant 56 : index
    %c0_81 = arith.constant 0 : index
    %135 = vector.load %arg12[%c56, %c0_81] : memref<72x256xf32, #tpu.memory_space<vmem>>, vector<8x256xf32>
    tpu.vector_store %arg12[%c56, %c0_81], %134 {strides = array<i32>} : memref<72x256xf32, #tpu.memory_space<vmem>>, vector<8x256xf32>,
    %c239_i32_82 = arith.constant 239 : i32
    %136 = tpu.dynamic_rotate %104 by %c239_i32_82 dim 1 : vector<8x256xf32>, i32 -> vector<8x256xf32>
    %137 = vector.broadcast %8 : vector<1x256xf32> to vector<8x256xf32>
    %138 = arith.mulf %136, %137 : vector<8x256xf32>
    %c64_83 = arith.constant 64 : index
    %c0_84 = arith.constant 0 : index
    %139 = vector.load %arg12[%c64_83, %c0_84] : memref<72x256xf32, #tpu.memory_space<vmem>>, vector<8x256xf32>
    tpu.vector_store %arg12[%c64_83, %c0_84], %138 {strides = array<i32>} : memref<72x256xf32, #tpu.memory_space<vmem>>, vector<8x256xf32>,
    %c0_85 = arith.constant 0 : index
    %c0_86 = arith.constant 0 : index
    %140 = vector.load %arg12[%c0_85, %c0_86] : memref<72x256xf32, #tpu.memory_space<vmem>>, vector<72x256xf32>
    %141 = arith.truncf %140 : vector<72x256xf32> to vector<72x256xbf16>
    %c0_87 = arith.constant 0 : index
    %c0_88 = arith.constant 0 : index
    %142 = vector.load %arg7[%c0_87, %c0_88] : memref<16x72xbf16, #tpu.memory_space<vmem>>, vector<16x72xbf16>
    %cst_89 = arith.constant dense<0.000000e+00> : vector<16x256xf32>
    %143 = tpu.matmul %142, %141, %cst_89 {dimension_numbers = #tpu.dot_dimension_numbers<[1], [0], [0], [1], [0, 0, 1, 1], [], []>} : vector<16x72xbf16>, vector<72x256xbf16>, vector<16x256xf32> -> vector<16x256xf32>
    %c0_90 = arith.constant 0 : index
    %c0_91 = arith.constant 0 : index
    %144 = vector.load %arg8[%c0_90, %c0_91] : memref<16x1xf32, #tpu.memory_space<vmem>>, vector<16x1xf32>
    %145 = vector.broadcast %144 : vector<16x1xf32> to vector<16x256xf32>
    %146 = arith.addf %143, %145 : vector<16x256xf32>
    %cst_92 = arith.constant 0.000000e+00 : f32
    %147 = vector.broadcast %cst_92 : f32 to vector<16x256xf32>
    %148 = arith.cmpf ogt, %146, %147 : vector<16x256xf32>
    %cst_93 = arith.constant 0.00999999977 : f32
    %149 = vector.broadcast %cst_93 : f32 to vector<16x256xf32>
    %150 = arith.mulf %149, %146 : vector<16x256xf32>
    %151 = arith.select %148, %146, %150 : vector<16x256xi1>, vector<16x256xf32>
    %152 = arith.addf %151, %57 : vector<16x256xf32>
    %c0_94 = arith.constant 0 : index
    %c0_95 = arith.constant 0 : index
    %c0_96 = arith.constant 0 : index
    %153 = vector.load %arg9[%c0_94, %c0_95, %c0_96] : memref<1x16x256xf32, #tpu.memory_space<vmem>>, vector<1x16x256xf32>
    %154 = vector.shape_cast %153 : vector<1x16x256xf32> to vector<16x256xf32>
    %155 = vector.shape_cast %152 : vector<16x256xf32> to vector<1x16x256xf32>
    tpu.vector_store %arg9[%c0_94, %c0_95, %c0_96], %155 {strides = array<i32>} : memref<1x16x256xf32, #tpu.memory_space<vmem>>, vector<1x16x256xf32>,
    return
  }
  func.func @transform_0(%arg0: i32) -> (i32, i32, i32) {
    %c0_i32 = arith.constant 0 : i32
    %c0_i32_0 = arith.constant 0 : i32
    %c0_i32_1 = arith.constant 0 : i32
    return %arg0, %c0_i32, %c0_i32_0 : i32, i32, i32
  }
  func.func @transform_1(%arg0: i32) -> (i32, i32) {
    %c0_i32 = arith.constant 0 : i32
    %c0_i32_0 = arith.constant 0 : i32
    %c0_i32_1 = arith.constant 0 : i32
    return %c0_i32, %c0_i32_0 : i32, i32
  }
  func.func @transform_2(%arg0: i32) -> (i32, i32) {
    %c0_i32 = arith.constant 0 : i32
    %c0_i32_0 = arith.constant 0 : i32
    %c0_i32_1 = arith.constant 0 : i32
    return %c0_i32, %c0_i32_0 : i32, i32
  }
  func.func @transform_3(%arg0: i32) -> (i32, i32) {
    %c0_i32 = arith.constant 0 : i32
    %c0_i32_0 = arith.constant 0 : i32
    %c0_i32_1 = arith.constant 0 : i32
    return %c0_i32, %c0_i32_0 : i32, i32
  }
  func.func @transform_4(%arg0: i32) -> (i32, i32) {
    %c0_i32 = arith.constant 0 : i32
    %c0_i32_0 = arith.constant 0 : i32
    %c0_i32_1 = arith.constant 0 : i32
    return %c0_i32, %c0_i32_0 : i32, i32
  }
  func.func @transform_5(%arg0: i32) -> (i32, i32) {
    %c0_i32 = arith.constant 0 : i32
    %c0_i32_0 = arith.constant 0 : i32
    %c0_i32_1 = arith.constant 0 : i32
    return %c0_i32, %c0_i32_0 : i32, i32
  }
  func.func @transform_6(%arg0: i32) -> (i32, i32) {
    %c0_i32 = arith.constant 0 : i32
    %c0_i32_0 = arith.constant 0 : i32
    %c0_i32_1 = arith.constant 0 : i32
    return %c0_i32, %c0_i32_0 : i32, i32
  }
  func.func @transform_7(%arg0: i32) -> (i32, i32) {
    %c0_i32 = arith.constant 0 : i32
    %c0_i32_0 = arith.constant 0 : i32
    %c0_i32_1 = arith.constant 0 : i32
    return %c0_i32, %c0_i32_0 : i32, i32
  }
  func.func @transform_8(%arg0: i32) -> (i32, i32, i32) {
    %c0_i32 = arith.constant 0 : i32
    %c0_i32_0 = arith.constant 0 : i32
    %c0_i32_1 = arith.constant 0 : i32
    return %arg0, %c0_i32, %c0_i32_0 : i32, i32, i32
  }
}

</mosaic_0001>

<llo_original>
// kernel: res_conv_forward.1
$region0: #{res_conv_forward.1}
  #allocation0 [shape = 'u32[]', space=smem, size = 0x4, offset = 0x4, fixed_abs, tag = 'smem constant byte address 0x4 - core index']
  #allocation1 [shape = 'u32[144,128]{1,0:T(1,128)}', space=vmem, size = 0x12000, scoped, tag = 'internal scratch']
  #allocation2 [shape = 'f32[36,256]{1,0:T(8,128)}', space=vmem, size = 0xa000, scoped, tag = 'scratch operand']
  #allocation3 [shape = 'f32[144,256]{1,0:T(8,128)}', space=vmem, size = 0x24000, scoped, tag = 'scratch operand']
  #allocation4 [shape = 'f32[72,256]{1,0:T(8,128)}', space=vmem, size = 0x12000, scoped, tag = 'scratch operand']
  %s0 = inlined_call_operand.vmem [shape: f32[2,4,256], index: 0, kind: input, shape index: {}]
  %s1 = inlined_call_operand.vmem [shape: f32[9,256], index: 1, kind: input, shape index: {}]
  %s2 = inlined_call_operand.vmem [shape: bf16[16,36], index: 2, kind: input, shape index: {}]
  %s3 = inlined_call_operand.vmem [shape: f32[16,1], index: 3, kind: input, shape index: {}]
  %s4 = inlined_call_operand.vmem [shape: bf16[8,144], index: 4, kind: input, shape index: {}]
  %s5 = inlined_call_operand.vmem [shape: f32[8,1], index: 5, kind: input, shape index: {}]
  %s6 = inlined_call_operand.vmem [shape: bf16[16,72], index: 6, kind: input, shape index: {}]
  %s7 = inlined_call_operand.vmem [shape: f32[16,1], index: 7, kind: input, shape index: {}]
  %s8 = inlined_call_operand.vmem [shape: f32[2,16,256], index: 8, kind: output, shape index: {}]
  %s9 = sld [smem:[#allocation0]]
  $region65: #{res_conv_forward.1} parent=0
    _
  %s11 = ssub.s32 1, %s9
  %s12 = scalar_select 0, %s11, %s9
  loop: start=0, step=1, limit=4
  $region2: #{res_conv_forward.1} parent=0 // loop_pre_header
    _
  $region3: #{res_conv_forward.1} parent=0 // loop_header
    %s14 = sphi 0, %s18
    %p15 = scmp.ge.s32.totalorder %s14, 4
    %s24 = sphi 0, %s26
    %s27 = sphi 0, %s24
    %s28 = sphi 0, %s27
    %s44 = sphi 0, %s28
    %s48 = sphi 0, %s48
    %s50 = sphi 0, %s48
    %s51 = sphi 0, %s50
    %s65 = sphi 0, %s51
    %s69 = sphi 0, %s69
    %s71 = sphi 0, %s69
    %s72 = sphi 0, %s71
    %s86 = sphi 0, %s72
    %s90 = sphi 0, %s90
    %s92 = sphi 0, %s90
    %s93 = sphi 0, %s92
    %s107 = sphi 0, %s93
    %s111 = sphi 0, %s111
    %s113 = sphi 0, %s111
    %s114 = sphi 0, %s113
    %s128 = sphi 0, %s114
    %s132 = sphi 0, %s132
    %s134 = sphi 0, %s132
    %s135 = sphi 0, %s134
    %s149 = sphi 0, %s135
    %s153 = sphi 0, %s153
    %s155 = sphi 0, %s153
    %s156 = sphi 0, %s155
    %s170 = sphi 0, %s156
    %s174 = sphi 0, %s174
    %s176 = sphi 0, %s174
    %s177 = sphi 0, %s176
    %s191 = sphi 0, %s177
    %s197 = sphi 0, %s199
    %s200 = sphi 0, %s197
    %s201 = sphi 0, %s200
    %s217 = sphi 0, %s201
  $region4: #{res_conv_forward.1} parent=0 // loop_header_branch
    %17 = sbr.rel (%p15) target = $region8
  $region5: #{res_conv_forward.1} parent=0 // loop_body
    %s19 = ssub.s32 %s14, 1
    %s20 = ssub.s32 %s14, 2
    %s21 = sadd.s32 %s14, 1
    %s22 = ssub.s32 %s14, %s21
    %p23 = scmp.eq.s32.totalorder %s22, 0
    %s25 = sadd.s32 %s24, 1
    %s26 = scalar_select %p23, %s24, %s25
    %p29 = pneg %p23
    %p30 = scmp.eq.s32.totalorder %s14, 1
    %p31 = por %p29, %p30
    %p32 = scmp.ne.s32.totalorder %s24, %s27
    %p33 = scmp.eq.s32.totalorder %s14, 0
    %p34 = por %p32, %p33
    %p35 = scmp.ne.s32.totalorder %s24, %s27
    %p36 = scmp.eq.s32.totalorder %s19, 1
    %p37 = por %p35, %p36
    %p38 = scmp.ne.s32.totalorder %s27, %s28
    %p39 = scmp.eq.s32.totalorder %s19, 0
    %p40 = por %p38, %p39
    %p41 = scmp.ne.s32.totalorder %s27, %s28
    %p42 = scmp.eq.s32.totalorder %s20, 1
    %p43 = por %p41, %p42
    %p45 = scmp.ne.s32.totalorder %s28, %s44
    %p46 = scmp.eq.s32.totalorder %s20, 0
    %p47 = por %p45, %p46
    %s49 = sadd.s32 %s48, 1
    %p52 = scmp.eq.s32.totalorder %s14, 1
    %p53 = scmp.ne.s32.totalorder %s48, %s50
    %p54 = scmp.eq.s32.totalorder %s14, 0
    %p55 = por %p53, %p54
    %p56 = scmp.ne.s32.totalorder %s48, %s50
    %p57 = scmp.eq.s32.totalorder %s19, 1
    %p58 = por %p56, %p57
    %p59 = scmp.ne.s32.totalorder %s50, %s51
    %p60 = scmp.eq.s32.totalorder %s19, 0
    %p61 = por %p59, %p60
    %p62 = scmp.ne.s32.totalorder %s50, %s51
    %p63 = scmp.eq.s32.totalorder %s20, 1
    %p64 = por %p62, %p63
    %p66 = scmp.ne.s32.totalorder %s51, %s65
    %p67 = scmp.eq.s32.totalorder %s20, 0
    %p68 = por %p66, %p67
    %s70 = sadd.s32 %s69, 1
    %p73 = scmp.eq.s32.totalorder %s14, 1
    %p74 = scmp.ne.s32.totalorder %s69, %s71
    %p75 = scmp.eq.s32.totalorder %s14, 0
    %p76 = por %p74, %p75
    %p77 = scmp.ne.s32.totalorder %s69, %s71
    %p78 = scmp.eq.s32.totalorder %s19, 1
    %p79 = por %p77, %p78
    %p80 = scmp.ne.s32.totalorder %s71, %s72
    %p81 = scmp.eq.s32.totalorder %s19, 0
    %p82 = por %p80, %p81
    %p83 = scmp.ne.s32.totalorder %s71, %s72
    %p84 = scmp.eq.s32.totalorder %s20, 1
    %p85 = por %p83, %p84
    %p87 = scmp.ne.s32.totalorder %s72, %s86
    %p88 = scmp.eq.s32.totalorder %s20, 0
    %p89 = por %p87, %p88
    %s91 = sadd.s32 %s90, 1
    %p94 = scmp.eq.s32.totalorder %s14, 1
    %p95 = scmp.ne.s32.totalorder %s90, %s92
    %p96 = scmp.eq.s32.totalorder %s14, 0
    %p97 = por %p95, %p96
    %p98 = scmp.ne.s32.totalorder %s90, %s92
    %p99 = scmp.eq.s32.totalorder %s19, 1
    %p100 = por %p98, %p99
    %p101 = scmp.ne.s32.totalorder %s92, %s93
    %p102 = scmp.eq.s32.totalorder %s19, 0
    %p103 = por %p101, %p102
    %p104 = scmp.ne.s32.totalorder %s92, %s93
    %p105 = scmp.eq.s32.totalorder %s20, 1
    %p106 = por %p104, %p105
    %p108 = scmp.ne.s32.totalorder %s93, %s107
    %p109 = scmp.eq.s32.totalorder %s20, 0
    %p110 = por %p108, %p109
    %s112 = sadd.s32 %s111, 1
    %p115 = scmp.eq.s32.totalorder %s14, 1
    %p116 = scmp.ne.s32.totalorder %s111, %s113
    %p117 = scmp.eq.s32.totalorder %s14, 0
    %p118 = por %p116, %p117
    %p119 = scmp.ne.s32.totalorder %s111, %s113
    %p120 = scmp.eq.s32.totalorder %s19, 1
    %p121 = por %p119, %p120
    %p122 = scmp.ne.s32.totalorder %s113, %s114
    %p123 = scmp.eq.s32.totalorder %s19, 0
    %p124 = por %p122, %p123
    %p125 = scmp.ne.s32.totalorder %s113, %s114
    %p126 = scmp.eq.s32.totalorder %s20, 1
    %p127 = por %p125, %p126
    %p129 = scmp.ne.s32.totalorder %s114, %s128
    %p130 = scmp.eq.s32.totalorder %s20, 0
    %p131 = por %p129, %p130
    %s133 = sadd.s32 %s132, 1
    %p136 = scmp.eq.s32.totalorder %s14, 1
    %p137 = scmp.ne.s32.totalorder %s132, %s134
    %p138 = scmp.eq.s32.totalorder %s14, 0
    %p139 = por %p137, %p138
    %p140 = scmp.ne.s32.totalorder %s132, %s134
    %p141 = scmp.eq.s32.totalorder %s19, 1
    %p142 = por %p140, %p141
    %p143 = scmp.ne.s32.totalorder %s134, %s135
    %p144 = scmp.eq.s32.totalorder %s19, 0
    %p145 = por %p143, %p144
    %p146 = scmp.ne.s32.totalorder %s134, %s135
    %p147 = scmp.eq.s32.totalorder %s20, 1
    %p148 = por %p146, %p147
    %p150 = scmp.ne.s32.totalorder %s135, %s149
    %p151 = scmp.eq.s32.totalorder %s20, 0
    %p152 = por %p150, %p151
    %s154 = sadd.s32 %s153, 1
    %p157 = scmp.eq.s32.totalorder %s14, 1
    %p158 = scmp.ne.s32.totalorder %s153, %s155
    %p159 = scmp.eq.s32.totalorder %s14, 0
    %p160 = por %p158, %p159
    %p161 = scmp.ne.s32.totalorder %s153, %s155
    %p162 = scmp.eq.s32.totalorder %s19, 1
    %p163 = por %p161, %p162
    %p164 = scmp.ne.s32.totalorder %s155, %s156
    %p165 = scmp.eq.s32.totalorder %s19, 0
    %p166 = por %p164, %p165
    %p167 = scmp.ne.s32.totalorder %s155, %s156
    %p168 = scmp.eq.s32.totalorder %s20, 1
    %p169 = por %p167, %p168
    %p171 = scmp.ne.s32.totalorder %s156, %s170
    %p172 = scmp.eq.s32.totalorder %s20, 0
    %p173 = por %p171, %p172
    %s175 = sadd.s32 %s174, 1
    %p178 = scmp.eq.s32.totalorder %s14, 1
    %p179 = scmp.ne.s32.totalorder %s174, %s176
    %p180 = scmp.eq.s32.totalorder %s14, 0
    %p181 = por %p179, %p180
    %p182 = scmp.ne.s32.totalorder %s174, %s176
    %p183 = scmp.eq.s32.totalorder %s19, 1
    %p184 = por %p182, %p183
    %p185 = scmp.ne.s32.totalorder %s176, %s177
    %p186 = scmp.eq.s32.totalorder %s19, 0
    %p187 = por %p185, %p186
    %p188 = scmp.ne.s32.totalorder %s176, %s177
    %p189 = scmp.eq.s32.totalorder %s20, 1
    %p190 = por %p188, %p189
    %p192 = scmp.ne.s32.totalorder %s177, %s191
    %p193 = scmp.eq.s32.totalorder %s20, 0
    %p194 = por %p192, %p193
    %s195 = ssub.s32 %s14, %s21
    %p196 = scmp.eq.s32.totalorder %s195, 0
    %s198 = sadd.s32 %s197, 1
    %s199 = scalar_select %p196, %s197, %s198
    %p202 = pneg %p196
    %p203 = scmp.eq.s32.totalorder %s14, 1
    %p204 = por %p202, %p203
    %p205 = scmp.ne.s32.totalorder %s197, %s200
    %p206 = scmp.eq.s32.totalorder %s14, 0
    %p207 = por %p205, %p206
    %p208 = scmp.ne.s32.totalorder %s197, %s200
    %p209 = scmp.eq.s32.totalorder %s19, 1
    %p210 = por %p208, %p209
    %p211 = scmp.ne.s32.totalorder %s200, %s201
    %p212 = scmp.eq.s32.totalorder %s19, 0
    %p213 = por %p211, %p212
    %p214 = scmp.ne.s32.totalorder %s200, %s201
    %p215 = scmp.eq.s32.totalorder %s20, 1
    %p216 = por %p214, %p215
    %p218 = scmp.ne.s32.totalorder %s201, %s217
    %p219 = scmp.eq.s32.totalorder %s20, 0
    %p220 = por %p218, %p219
    %p221 = scmp.le.s32.totalorder 1, %s14
    %p222 = scmp.lt.s32.totalorder %s14, 3
    %p223 = pnand %p221, %p222
    %p224 = pneg %p223
    // Predicated region
    $region9: #{res_conv_forward.1} parent=5 // pred_check
      _
    $region10: #{res_conv_forward.1} parent=5 // pred_check_branch
      %226 = sbr.rel (%p223) target = $region12
    $region11: #{res_conv_forward.1} parent=5 // pred_region
      %s227 = ssub.s32 %s14, 1
      // Predicated region
      $region13: #{res_conv_forward.1} parent=11 // pred_check
        %p228 = pneg %p61
      $region14: #{res_conv_forward.1} parent=11 // pred_check_branch
        %230 = sbr.rel (%p228) target = $region16
      $region15: #{res_conv_forward.1} parent=11 // pred_region
        _
      $region16: #{res_conv_forward.1} parent=11 // pred_fallthru
        _
      // Predicated region
      $region17: #{res_conv_forward.1} parent=11 // pred_check
        %p231 = pneg %p82
      $region18: #{res_conv_forward.1} parent=11 // pred_check_branch
        %233 = sbr.rel (%p231) target = $region20
      $region19: #{res_conv_forward.1} parent=11 // pred_region
        _
      $region20: #{res_conv_forward.1} parent=11 // pred_fallthru
        _
      // Predicated region
      $region21: #{res_conv_forward.1} parent=11 // pred_check
        %p234 = pneg %p103
      $region22: #{res_conv_forward.1} parent=11 // pred_check_branch
        %236 = sbr.rel (%p234) target = $region24
      $region23: #{res_conv_forward.1} parent=11 // pred_region
        _
      $region24: #{res_conv_forward.1} parent=11 // pred_fallthru
        _
      // Predicated region
      $region25: #{res_conv_forward.1} parent=11 // pred_check
        %p237 = pneg %p124
      $region26: #{res_conv_forward.1} parent=11 // pred_check_branch
        %239 = sbr.rel (%p237) target = $region28
      $region27: #{res_conv_forward.1} parent=11 // pred_region
        _
      $region28: #{res_conv_forward.1} parent=11 // pred_fallthru
        _
      // Predicated region
      $region29: #{res_conv_forward.1} parent=11 // pred_check
        %p240 = pneg %p145
      $region30: #{res_conv_forward.1} parent=11 // pred_check_branch
        %242 = sbr.rel (%p240) target = $region32
      $region31: #{res_conv_forward.1} parent=11 // pred_region
        _
      $region32: #{res_conv_forward.1} parent=11 // pred_fallthru
        _
      // Predicated region
      $region33: #{res_conv_forward.1} parent=11 // pred_check
        %p243 = pneg %p166
      $region34: #{res_conv_forward.1} parent=11 // pred_check_branch
        %245 = sbr.rel (%p243) target = $region36
      $region35: #{res_conv_forward.1} parent=11 // pred_region
        _
      $region36: #{res_conv_forward.1} parent=11 // pred_fallthru
        _
      // Predicated region
      $region37: #{res_conv_forward.1} parent=11 // pred_check
        %p246 = pneg %p187
      $region38: #{res_conv_forward.1} parent=11 // pred_check_branch
        %248 = sbr.rel (%p246) target = $region40
      $region39: #{res_conv_forward.1} parent=11 // pred_region
        _
      $region40: #{res_conv_forward.1} parent=11 // pred_fallthru
        _
    $region12: #{res_conv_forward.1} parent=5 // pred_fallthru
      _
    %p249 = scmp.lt.s32.totalorder %s14, 2
    // Predicated region
    $region41: #{res_conv_forward.1} parent=5 // pred_check
      %p250 = pneg %p249
    $region42: #{res_conv_forward.1} parent=5 // pred_check_branch
      %252 = sbr.rel (%p250) target = $region44
    $region43: #{res_conv_forward.1} parent=5 // pred_region
      // Predicated region
      $region45: #{res_conv_forward.1} parent=43 // pred_check
        %p253 = pneg %p34
      $region46: #{res_conv_forward.1} parent=43 // pred_check_branch
        %255 = sbr.rel (%p253) target = $region48
      $region47: #{res_conv_forward.1} parent=43 // pred_region
        %p256 = scmp.lt.s32.totalorder %s14, 1
        %s257 = scalar_select %p256, %s14, 1
        %s258 = smul.addr %s257, 2
        %s259 = smul.addr %s258, 4
        %s260 = scalar_lea.vmem %s0, %s259
      $region48: #{res_conv_forward.1} parent=43 // pred_fallthru
        _
    $region44: #{res_conv_forward.1} parent=5 // pred_fallthru
      _
    %p261 = scmp.le.s32.totalorder 1, %s14
    %p262 = scmp.lt.s32.totalorder %s14, 3
    %p263 = pnand %p261, %p262
    %p264 = pneg %p263
    // Predicated region
    $region49: #{res_conv_forward.1} parent=5 // pred_check
      _
    $region50: #{res_conv_forward.1} parent=5 // pred_check_branch
      %266 = sbr.rel (%p263) target = $region52
    $region51: #{res_conv_forward.1} parent=5 // pred_region
      %s267 = ssub.s32 %s14, 1
      %p268 = scmp.lt.s32.totalorder %s19, 1
      %s269 = scalar_select %p268, %s19, 1
      %s270 = smul.addr %s269, 2
      %s271 = smul.addr %s270, 4
      %s272 = scalar_lea.vmem %s0, %s271
      %p273 = pneg %p40
      %p274 = pneg %p37
      %p275 = pneg %p61
      %p276 = pneg %p58
      %p277 = pneg %p82
      %p278 = pneg %p79
      %p279 = pneg %p103
      %p280 = pneg %p100
      %p281 = pneg %p124
      %p282 = pneg %p121
      %p283 = pneg %p145
      %p284 = pneg %p142
      %p285 = pneg %p166
      %p286 = pneg %p163
      %p287 = pneg %p187
      %p288 = pneg %p184
      %p289 = pneg %p213
      %p290 = pneg %p210
      %p291 = scmp.lt.s32.totalorder %s19, 1
      %s292 = scalar_select %p291, %s19, 1
      %s293 = smul.addr %s292, 4
      %s294 = smul.addr %s293, 8
      %s295 = scalar_lea.vmem %s8, %s294
      %p296 = scmp.lt.s32.totalorder %s19, 1
      %s297 = scalar_select %p296, %s19, 1
      %s298 = smul.addr %s297, 2
      %s299 = smul.addr %s298, 4
      %s300 = scalar_lea.vmem %s0, %s299
      %p301 = scmp.lt.s32.totalorder %s19, 1
      %s302 = scalar_select %p301, %s19, 1
      %s303 = smul.addr %s302, 4
      %s304 = smul.addr %s303, 8
      %s305 = scalar_lea.vmem %s8, %s304
      %v307 = vld [vmem:[%s1] ss:$8 sm:$0x3]
      %s308 = scalar_lea.vmem %s1, 1
      %v309 = vld [vmem:[%s308] ss:$8 sm:$0x3]
      %s310 = scalar_lea.vmem %s1, 2
      %v311 = vld [vmem:[%s310] ss:$8 sm:$0x3]
      %s312 = scalar_lea.vmem %s1, 3
      %v313 = vld [vmem:[%s312] ss:$8 sm:$0x3]
      %s314 = scalar_lea.vmem %s1, 4
      %v315 = vld [vmem:[%s314] ss:$8 sm:$0x3]
      %s316 = scalar_lea.vmem %s1, 5
      %v317 = vld [vmem:[%s316] ss:$8 sm:$0x3]
      %s318 = scalar_lea.vmem %s1, 6
      %v319 = vld [vmem:[%s318] ss:$8 sm:$0x3]
      %s320 = scalar_lea.vmem %s1, 7
      %v321 = vld [vmem:[%s320] ss:$8 sm:$0x3]
      %s322 = scalar_lea.vmem %s1, 16
      %v323 = vld [vmem:[%s322] ss:$8 sm:$0x3]
      %v324 = vld [vmem:[%s300] sm:$0xff]
      %v326 = vcombine.high %v324, %v324
      %328 = vrot.lane.b32.xlu0 %v324, 17
      %v329 = vpop.permute.xlu0 %328
      %330 = vrot.lane.b32.xlu0 %v326, 17
      %v331 = vpop.permute.xlu0 %330
      %v332 = vlaneseq
      %v333 = vand.u32 %v332, 127
      %vm334 = vcmp.lt.s32.totalorder %v333, 17
      %v335 = vsel %vm334, %v329, %v331
      %v336 = vsel %vm334, %v331, %v329
      %v338 = vlaneseq
      %v339 = vshrl.u32 %v338, 7
      %v340 = vsub.s32 0, %v339
      %v341 = vrot.slane %v307, %v340
      %v342 = vlaneseq
      %v343 = vshrl.u32 %v342, 7
      %v344 = vsub.s32 1, %v343
      %v345 = vrot.slane %v307, %v344
      %v348 = vmul.f32 %v336, %v341
      %v349 = vmul.f32 %v335, %v345
      %350 = vst [vmem:[#allocation2] sm:$0xf] %v348
      %351 = vst [vmem:[#allocation2 + $0x8] sm:$0xf] %v349
      %352 = vrot.lane.b32.xlu0 %v324, 16
      %v353 = vpop.permute.xlu0 %352
      %354 = vrot.lane.b32.xlu0 %v326, 16
      %v355 = vpop.permute.xlu0 %354
      %vm356 = vcmp.lt.s32.totalorder %v333, 16
      %v357 = vsel %vm356, %v353, %v355
      %v358 = vsel %vm356, %v355, %v353
      %v360 = vlaneseq
      %v361 = vshrl.u32 %v360, 7
      %v362 = vsub.s32 0, %v361
      %v363 = vrot.slane %v309, %v362
      %v364 = vlaneseq
      %v365 = vshrl.u32 %v364, 7
      %v366 = vsub.s32 1, %v365
      %v367 = vrot.slane %v309, %v366
      %v370 = vmul.f32 %v358, %v363
      %v371 = vmul.f32 %v357, %v367
      %v374 = vrot.slane %v370, 4
      %v375 = vrot.slane %v371, 4
      %378 = vst [vmem:[#allocation2] sm:$0xf0] %v374
      %379 = vst [vmem:[#allocation2 + $0x8] sm:$0xf0] %v375
      %380 = vrot.lane.b32.xlu0 %v324, 15
      %v381 = vpop.permute.xlu0 %380
      %382 = vrot.lane.b32.xlu0 %v326, 15
      %v383 = vpop.permute.xlu0 %382
      %vm384 = vcmp.lt.s32.totalorder %v333, 15
      %v385 = vsel %vm384, %v381, %v383
      %v386 = vsel %vm384, %v383, %v381
      %v388 = vlaneseq
      %v389 = vshrl.u32 %v388, 7
      %v390 = vsub.s32 0, %v389
      %v391 = vrot.slane %v311, %v390
      %v392 = vlaneseq
      %v393 = vshrl.u32 %v392, 7
      %v394 = vsub.s32 1, %v393
      %v395 = vrot.slane %v311, %v394
      %v398 = vmul.f32 %v386, %v391
      %v399 = vmul.f32 %v385, %v395
      %400 = vst [vmem:[#allocation2 + $0x10] sm:$0xf] %v398
      %401 = vst [vmem:[#allocation2 + $0x18] sm:$0xf] %v399
      %402 = vrot.lane.b32.xlu0 %v324, 1
      %v403 = vpop.permute.xlu0 %402
      %404 = vrot.lane.b32.xlu0 %v326, 1
      %v405 = vpop.permute.xlu0 %404
      %vm406 = vcmp.lt.s32.totalorder %v333, 1
      %v407 = vsel %vm406, %v403, %v405
      %v408 = vsel %vm406, %v405, %v403
      %v410 = vlaneseq
      %v411 = vshrl.u32 %v410, 7
      %v412 = vsub.s32 0, %v411
      %v413 = vrot.slane %v313, %v412
      %v414 = vlaneseq
      %v415 = vshrl.u32 %v414, 7
      %v416 = vsub.s32 1, %v415
      %v417 = vrot.slane %v313, %v416
      %v420 = vmul.f32 %v408, %v413
      %v421 = vmul.f32 %v407, %v417
      %v424 = vrot.slane %v420, 4
      %v425 = vrot.slane %v421, 4
      %428 = vst [vmem:[#allocation2 + $0x10] sm:$0xf0] %v424
      %429 = vst [vmem:[#allocation2 + $0x18] sm:$0xf0] %v425
      %v431 = vlaneseq
      %v432 = vshrl.u32 %v431, 7
      %v433 = vsub.s32 0, %v432
      %v434 = vrot.slane %v315, %v433
      %v435 = vlaneseq
      %v436 = vshrl.u32 %v435, 7
      %v437 = vsub.s32 1, %v436
      %v438 = vrot.slane %v315, %v437
      %v439 = vcombine.low %v434, %v438
      %v441 = vmul.f32 %v324, %v439
      %v443 = vcombine.high %v441, %v441
      %445 = vst [vmem:[#allocation2 + $0x20] sm:$0xf] %v441
      %446 = vst [vmem:[#allocation2 + $0x28] sm:$0xf] %v443
      %447 = vrot.lane.b32.xlu0 %v324, 127
      %v448 = vpop.permute.xlu0 %447
      %449 = vrot.lane.b32.xlu0 %v326, 127
      %v450 = vpop.permute.xlu0 %449
      %vm451 = vcmp.lt.s32.totalorder %v333, 127
      %v452 = vsel %vm451, %v448, %v450
      %v453 = vsel %vm451, %v450, %v448
      %v455 = vlaneseq
      %v456 = vshrl.u32 %v455, 7
      %v457 = vsub.s32 0, %v456
      %v458 = vrot.slane %v317, %v457
      %v459 = vlaneseq
      %v460 = vshrl.u32 %v459, 7
      %v461 = vsub.s32 1, %v460
      %v462 = vrot.slane %v317, %v461
      %v465 = vmul.f32 %v452, %v458
      %v466 = vmul.f32 %v453, %v462
      %v469 = vrot.slane %v465, 4
      %v470 = vrot.slane %v466, 4
      %473 = vst [vmem:[#allocation2 + $0x20] sm:$0xf0] %v469
      %474 = vst [vmem:[#allocation2 + $0x28] sm:$0xf0] %v470
      %475 = vrot.lane.b32.xlu0 %v324, 113
      %v476 = vpop.permute.xlu0 %475
      %477 = vrot.lane.b32.xlu0 %v326, 113
      %v478 = vpop.permute.xlu0 %477
      %vm479 = vcmp.lt.s32.totalorder %v333, 113
      %v480 = vsel %vm479, %v476, %v478
      %v481 = vsel %vm479, %v478, %v476
      %v483 = vlaneseq
      %v484 = vshrl.u32 %v483, 7
      %v485 = vsub.s32 0, %v484
      %v486 = vrot.slane %v319, %v485
      %v487 = vlaneseq
      %v488 = vshrl.u32 %v487, 7
      %v489 = vsub.s32 1, %v488
      %v490 = vrot.slane %v319, %v489
      %v493 = vmul.f32 %v480, %v486
      %v494 = vmul.f32 %v481, %v490
      %495 = vst [vmem:[#allocation2 + $0x30] sm:$0xf] %v493
      %496 = vst [vmem:[#allocation2 + $0x38] sm:$0xf] %v494
      %497 = vrot.lane.b32.xlu0 %v324, 112
      %v498 = vpop.permute.xlu0 %497
      %499 = vrot.lane.b32.xlu0 %v326, 112
      %v500 = vpop.permute.xlu0 %499
      %vm501 = vcmp.lt.s32.totalorder %v333, 112
      %v502 = vsel %vm501, %v498, %v500
      %v503 = vsel %vm501, %v500, %v498
      %v505 = vlaneseq
      %v506 = vshrl.u32 %v505, 7
      %v507 = vsub.s32 0, %v506
      %v508 = vrot.slane %v321, %v507
      %v509 = vlaneseq
      %v510 = vshrl.u32 %v509, 7
      %v511 = vsub.s32 1, %v510
      %v512 = vrot.slane %v321, %v511
      %v515 = vmul.f32 %v502, %v508
      %v516 = vmul.f32 %v503, %v512
      %v519 = vrot.slane %v515, 4
      %v520 = vrot.slane %v516, 4
      %523 = vst [vmem:[#allocation2 + $0x30] sm:$0xf0] %v519
      %524 = vst [vmem:[#allocation2 + $0x38] sm:$0xf0] %v520
      %525 = vrot.lane.b32.xlu0 %v324, 111
      %v526 = vpop.permute.xlu0 %525
      %527 = vrot.lane.b32.xlu0 %v326, 111
      %v528 = vpop.permute.xlu0 %527
      %vm529 = vcmp.lt.s32.totalorder %v333, 111
      %v530 = vsel %vm529, %v526, %v528
      %v531 = vsel %vm529, %v528, %v526
      %v533 = vlaneseq
      %v534 = vshrl.u32 %v533, 7
      %v535 = vsub.s32 0, %v534
      %v536 = vrot.slane %v323, %v535
      %v537 = vlaneseq
      %v538 = vshrl.u32 %v537, 7
      %v539 = vsub.s32 1, %v538
      %v540 = vrot.slane %v323, %v539
      %v543 = vmul.f32 %v530, %v536
      %v544 = vmul.f32 %v531, %v540
      %545 = vst [vmem:[#allocation2 + $0x40] sm:$0xf] %v543
      %546 = vst [vmem:[#allocation2 + $0x48] sm:$0xf] %v544
      %v547 = vld [vmem:[#allocation2] sm:$0xff]
      %v548 = vld [vmem:[#allocation2 + $0x8] sm:$0xff]
      %v549 = vld [vmem:[#allocation2 + $0x10] sm:$0xff]
      %v550 = vld [vmem:[#allocation2 + $0x18] sm:$0xff]
      %v551 = vld [vmem:[#allocation2 + $0x20] sm:$0xff]
      %v552 = vld [vmem:[#allocation2 + $0x28] sm:$0xff]
      %v553 = vld [vmem:[#allocation2 + $0x30] sm:$0xff]
      %v554 = vld [vmem:[#allocation2 + $0x38] sm:$0xff]
      %v555 = vld [vmem:[#allocation2 + $0x40] sm:$0xf]
      %v556 = vld [vmem:[#allocation2 + $0x48] sm:$0xf]
      %v557 = vpack.c.bf16 %v549, %v547
      %v558 = vpack.c.bf16 %v550, %v548
      %v559 = vpack.c.bf16 %v553, %v551
      %v560 = vpack.c.bf16 %v554, %v552
      %v561 = vpack.c.bf16 %v555, %v555
      %v562 = vpack.c.bf16 %v556, %v556
      %v563 = vld [vmem:[%s2] sm:$0xf]
      %v564 = vld [vmem:[%s2 + $0x4] sm:$0xf]
      %v565 = vld [vmem:[%s3] sm:$0xff]
      %v566 = vld [vmem:[%s3 + $0x8] sm:$0xff]
      %568 = vset.pattern.permute.xlu0 0
      %569 = vperm.xlu0 %568, %v565
      %v570 = vpop.permute.xlu0 %569
      %573 = vset.pattern.permute.xlu0 0
      %574 = vperm.xlu0 %573, %v566
      %v575 = vpop.permute.xlu0 %574
      %v579 = vunpack.c.l.b16 %v563
      %v580 = vunpack.c.l.b16 %v564
      %v581 = vpack.c.b16 %v580, %v579
      %vm582 = vcmask 293888
      %v584 = vsel %vm582, %v581, 0
      %vm586 = vcmask 1041408
      %v588 = vsel %vm586, %v561, 0
      %v591 = vsel %vm586, %v562, 0
      %593 = vmatprep.subr.bf16.mxu0 %v558
      %594 = vmatpush1.bf16.msra.mxu0 %v557
      %595 = vmatprep.subr.bf16.mxu0 %v560
      %596 = vmatpush1.bf16.msra.mxu0 %v559
      %597 = vmatprep.subr.bf16.mxu0 %v591
      %598 = vmatpush1.bf16.msra.mxu0 %v588
      %599 = vmatprep.subr.bf16.mxu0 0
      %600 = vmatpush1.bf16.msra.mxu0 0
      %601 = vmatprep.subr.bf16.mxu0 0
      %602 = vmatpush1.bf16.msra.mxu0 0
      %603 = vmatprep.subr.bf16.mxu0 0
      %604 = vmatpush1.bf16.msra.mxu0 0
      %605 = vmatprep.subr.bf16.mxu0 0
      %606 = vmatpush1.bf16.msra.mxu0 0
      %607 = vmatprep.subr.bf16.mxu0 0
      %608 = vmatpush1.bf16.msra.mxu0 0
      %609 = vmatprep.subr.bf16.mxu0 0
      %610 = vmatpush1.bf16.msra.mxu0 0
      %611 = vmatprep.subr.bf16.mxu0 0
      %612 = vmatpush1.bf16.msra.mxu0 0
      %613 = vmatprep.subr.bf16.mxu0 0
      %614 = vmatpush1.bf16.msra.mxu0 0
      %615 = vmatprep.subr.bf16.mxu0 0
      %616 = vmatpush1.bf16.msra.mxu0 0
      %617 = vmatprep.subr.bf16.mxu0 0
      %618 = vmatpush1.bf16.msra.mxu0 0
      %619 = vmatprep.subr.bf16.mxu0 0
      %620 = vmatpush1.bf16.msra.mxu0 0
      %621 = vmatprep.subr.bf16.mxu0 0
      %622 = vmatpush1.bf16.msra.mxu0 0
      %623 = vmatprep.subr.bf16.mxu0 0
      %624 = vmatpush1.bf16.msra.mxu0 0
      %625 = vmatprep.mubr.bf16.mxu0 0
      %626 = vmatmul.mubr.bf16.gmra.mrb[0].mxu0 %v584
      %v627 = vpop.f32.mrb[0].mxu0
      %v628 = vadd.f32 %v570, %v627
      %v629 = vpop.f32.mrb[0].mxu0
      %v630 = vadd.f32 %v570, %v629
      %v631 = vpop.f32.mrb[0].mxu0
      %v632 = vadd.f32 %v575, %v631
      %v633 = vpop.f32.mrb[0].mxu0
      %v634 = vadd.f32 %v575, %v633
      %635 = vdwg.mxu0
      %vm636 = vcmp.gt.f32.partialorder %v628, 0.0
      %vm637 = vcmp.gt.f32.partialorder %v630, 0.0
      %vm638 = vcmp.gt.f32.partialorder %v632, 0.0
      %vm639 = vcmp.gt.f32.partialorder %v634, 0.0
      %v640 = vmul.f32 %v628, 0.01
      %v641 = vmul.f32 %v630, 0.01
      %v642 = vmul.f32 %v632, 0.01
      %v643 = vmul.f32 %v634, 0.01
      %v644 = vsel %vm636, %v628, %v640
      %v645 = vsel %vm637, %v630, %v641
      %v646 = vsel %vm638, %v632, %v642
      %v647 = vsel %vm639, %v634, %v643
      %648 = vrot.lane.b32.xlu0 %v644, 17
      %v649 = vpop.permute.xlu0 %648
      %650 = vrot.lane.b32.xlu0 %v646, 17
      %v651 = vpop.permute.xlu0 %650
      %652 = vrot.lane.b32.xlu0 %v645, 17
      %v653 = vpop.permute.xlu0 %652
      %654 = vrot.lane.b32.xlu0 %v647, 17
      %v655 = vpop.permute.xlu0 %654
      %v656 = vsel %vm334, %v649, %v653
      %v657 = vsel %vm334, %v651, %v655
      %v658 = vsel %vm334, %v653, %v649
      %v659 = vsel %vm334, %v655, %v651
      %v660 = vmul.f32 %v658, %v341
      %v661 = vmul.f32 %v656, %v345
      %v662 = vmul.f32 %v659, %v341
      %v663 = vmul.f32 %v657, %v345
      %664 = vst [vmem:[#allocation3] sm:$0xff] %v660
      %665 = vst [vmem:[#allocation3 + $0x8] sm:$0xff] %v661
      %666 = vst [vmem:[#allocation3 + $0x10] sm:$0xff] %v662
      %667 = vst [vmem:[#allocation3 + $0x18] sm:$0xff] %v663
      %668 = vrot.lane.b32.xlu0 %v644, 16
      %v669 = vpop.permute.xlu0 %668
      %670 = vrot.lane.b32.xlu0 %v646, 16
      %v671 = vpop.permute.xlu0 %670
      %672 = vrot.lane.b32.xlu0 %v645, 16
      %v673 = vpop.permute.xlu0 %672
      %674 = vrot.lane.b32.xlu0 %v647, 16
      %v675 = vpop.permute.xlu0 %674
      %v676 = vsel %vm356, %v669, %v673
      %v677 = vsel %vm356, %v671, %v675
      %v678 = vsel %vm356, %v673, %v669
      %v679 = vsel %vm356, %v675, %v671
      %v680 = vmul.f32 %v678, %v363
      %v681 = vmul.f32 %v676, %v367
      %v682 = vmul.f32 %v679, %v363
      %v683 = vmul.f32 %v677, %v367
      %684 = vst [vmem:[#allocation3 + $0x20] sm:$0xff] %v680
      %685 = vst [vmem:[#allocation3 + $0x28] sm:$0xff] %v681
      %686 = vst [vmem:[#allocation3 + $0x30] sm:$0xff] %v682
      %687 = vst [vmem:[#allocation3 + $0x38] sm:$0xff] %v683
      %688 = vrot.lane.b32.xlu0 %v644, 15
      %v689 = vpop.permute.xlu0 %688
      %690 = vrot.lane.b32.xlu0 %v646, 15
      %v691 = vpop.permute.xlu0 %690
      %692 = vrot.lane.b32.xlu0 %v645, 15
      %v693 = vpop.permute.xlu0 %692
      %694 = vrot.lane.b32.xlu0 %v647, 15
      %v695 = vpop.permute.xlu0 %694
      %v696 = vsel %vm384, %v689, %v693
      %v697 = vsel %vm384, %v691, %v695
      %v698 = vsel %vm384, %v693, %v689
      %v699 = vsel %vm384, %v695, %v691
      %v700 = vmul.f32 %v698, %v391
      %v701 = vmul.f32 %v696, %v395
      %v702 = vmul.f32 %v699, %v391
      %v703 = vmul.f32 %v697, %v395
      %704 = vst [vmem:[#allocation3 + $0x40] sm:$0xff] %v700
      %705 = vst [vmem:[#allocation3 + $0x48] sm:$0xff] %v701
      %706 = vst [vmem:[#allocation3 + $0x50] sm:$0xff] %v702
      %707 = vst [vmem:[#allocation3 + $0x58] sm:$0xff] %v703
      %708 = vrot.lane.b32.xlu0 %v644, 1
      %v709 = vpop.permute.xlu0 %708
      %710 = vrot.lane.b32.xlu0 %v646, 1
      %v711 = vpop.permute.xlu0 %710
      %712 = vrot.lane.b32.xlu0 %v645, 1
      %v713 = vpop.permute.xlu0 %712
      %714 = vrot.lane.b32.xlu0 %v647, 1
      %v715 = vpop.permute.xlu0 %714
      %v716 = vsel %vm406, %v709, %v713
      %v717 = vsel %vm406, %v711, %v715
      %v718 = vsel %vm406, %v713, %v709
      %v719 = vsel %vm406, %v715, %v711
      %v720 = vmul.f32 %v718, %v413
      %v721 = vmul.f32 %v716, %v417
      %v722 = vmul.f32 %v719, %v413
      %v723 = vmul.f32 %v717, %v417
      %724 = vst [vmem:[#allocation3 + $0x60] sm:$0xff] %v720
      %725 = vst [vmem:[#allocation3 + $0x68] sm:$0xff] %v721
      %726 = vst [vmem:[#allocation3 + $0x70] sm:$0xff] %v722
      %727 = vst [vmem:[#allocation3 + $0x78] sm:$0xff] %v723
      %v730 = vmul.f32 %v644, %v434
      %v731 = vmul.f32 %v645, %v438
      %v732 = vmul.f32 %v646, %v434
      %v733 = vmul.f32 %v647, %v438
      %734 = vst [vmem:[#allocation3 + $0x80] sm:$0xff] %v730
      %735 = vst [vmem:[#allocation3 + $0x88] sm:$0xff] %v731
      %736 = vst [vmem:[#allocation3 + $0x90] sm:$0xff] %v732
      %737 = vst [vmem:[#allocation3 + $0x98] sm:$0xff] %v733
      %738 = vrot.lane.b32.xlu0 %v644, 127
      %v739 = vpop.permute.xlu0 %738
      %740 = vrot.lane.b32.xlu0 %v646, 127
      %v741 = vpop.permute.xlu0 %740
      %742 = vrot.lane.b32.xlu0 %v645, 127
      %v743 = vpop.permute.xlu0 %742
      %744 = vrot.lane.b32.xlu0 %v647, 127
      %v745 = vpop.permute.xlu0 %744
      %v746 = vsel %vm451, %v739, %v743
      %v747 = vsel %vm451, %v741, %v745
      %v748 = vsel %vm451, %v743, %v739
      %v749 = vsel %vm451, %v745, %v741
      %v750 = vmul.f32 %v746, %v458
      %v751 = vmul.f32 %v748, %v462
      %v752 = vmul.f32 %v747, %v458
      %v753 = vmul.f32 %v749, %v462
      %754 = vst [vmem:[#allocation3 + $0xa0] sm:$0xff] %v750
      %755 = vst [vmem:[#allocation3 + $0xa8] sm:$0xff] %v751
      %756 = vst [vmem:[#allocation3 + $0xb0] sm:$0xff] %v752
      %757 = vst [vmem:[#allocation3 + $0xb8] sm:$0xff] %v753
      %758 = vrot.lane.b32.xlu0 %v644, 113
      %v759 = vpop.permute.xlu0 %758
      %760 = vrot.lane.b32.xlu0 %v646, 113
      %v761 = vpop.permute.xlu0 %760
      %762 = vrot.lane.b32.xlu0 %v645, 113
      %v763 = vpop.permute.xlu0 %762
      %764 = vrot.lane.b32.xlu0 %v647, 113
      %v765 = vpop.permute.xlu0 %764
      %v766 = vsel %vm479, %v759, %v763
      %v767 = vsel %vm479, %v761, %v765
      %v768 = vsel %vm479, %v763, %v759
      %v769 = vsel %vm479, %v765, %v761
      %v770 = vmul.f32 %v766, %v486
      %v771 = vmul.f32 %v768, %v490
      %v772 = vmul.f32 %v767, %v486
      %v773 = vmul.f32 %v769, %v490
      %774 = vst [vmem:[#allocation3 + $0xc0] sm:$0xff] %v770
      %775 = vst [vmem:[#allocation3 + $0xc8] sm:$0xff] %v771
      %776 = vst [vmem:[#allocation3 + $0xd0] sm:$0xff] %v772
      %777 = vst [vmem:[#allocation3 + $0xd8] sm:$0xff] %v773
      %778 = vrot.lane.b32.xlu0 %v644, 112
      %v779 = vpop.permute.xlu0 %778
      %780 = vrot.lane.b32.xlu0 %v646, 112
      %v781 = vpop.permute.xlu0 %780
      %782 = vrot.lane.b32.xlu0 %v645, 112
      %v783 = vpop.permute.xlu0 %782
      %784 = vrot.lane.b32.xlu0 %v647, 112
      %v785 = vpop.permute.xlu0 %784
      %v786 = vsel %vm501, %v779, %v783
      %v787 = vsel %vm501, %v781, %v785
      %v788 = vsel %vm501, %v783, %v779
      %v789 = vsel %vm501, %v785, %v781
      %v790 = vmul.f32 %v786, %v508
      %v791 = vmul.f32 %v788, %v512
      %v792 = vmul.f32 %v787, %v508
      %v793 = vmul.f32 %v789, %v512
      %794 = vst [vmem:[#allocation3 + $0xe0] sm:$0xff] %v790
      %795 = vst [vmem:[#allocation3 + $0xe8] sm:$0xff] %v791
      %796 = vst [vmem:[#allocation3 + $0xf0] sm:$0xff] %v792
      %797 = vst [vmem:[#allocation3 + $0xf8] sm:$0xff] %v793
      %798 = vrot.lane.b32.xlu0 %v644, 111
      %v799 = vpop.permute.xlu0 %798
      %800 = vrot.lane.b32.xlu0 %v646, 111
      %v801 = vpop.permute.xlu0 %800
      %802 = vrot.lane.b32.xlu0 %v645, 111
      %v803 = vpop.permute.xlu0 %802
      %804 = vrot.lane.b32.xlu0 %v647, 111
      %v805 = vpop.permute.xlu0 %804
      %v806 = vsel %vm529, %v799, %v803
      %v807 = vsel %vm529, %v801, %v805
      %v808 = vsel %vm529, %v803, %v799
      %v809 = vsel %vm529, %v805, %v801
      %v810 = vmul.f32 %v806, %v536
      %v811 = vmul.f32 %v808, %v540
      %v812 = vmul.f32 %v807, %v536
      %v813 = vmul.f32 %v809, %v540
      %814 = vst [vmem:[#allocation3 + $0x100] sm:$0xff] %v810
      %815 = vst [vmem:[#allocation3 + $0x108] sm:$0xff] %v811
      %816 = vst [vmem:[#allocation3 + $0x110] sm:$0xff] %v812
      %817 = vst [vmem:[#allocation3 + $0x118] sm:$0xff] %v813
      %v818 = vld [vmem:[#allocation3] sm:$0xff]
      %v819 = vld [vmem:[#allocation3 + $0x8] sm:$0xff]
      %v820 = vld [vmem:[#allocation3 + $0x10] sm:$0xff]
      %v821 = vld [vmem:[#allocation3 + $0x18] sm:$0xff]
      %v822 = vld [vmem:[#allocation3 + $0x20] sm:$0xff]
      %v823 = vld [vmem:[#allocation3 + $0x28] sm:$0xff]
      %v824 = vld [vmem:[#allocation3 + $0x30] sm:$0xff]
      %v825 = vld [vmem:[#allocation3 + $0x38] sm:$0xff]
      %v826 = vld [vmem:[#allocation3 + $0x40] sm:$0xff]
      %v827 = vld [vmem:[#allocation3 + $0x48] sm:$0xff]
      %v828 = vld [vmem:[#allocation3 + $0x50] sm:$0xff]
      %v829 = vld [vmem:[#allocation3 + $0x58] sm:$0xff]
      %v830 = vld [vmem:[#allocation3 + $0x60] sm:$0xff]
      %v831 = vld [vmem:[#allocation3 + $0x68] sm:$0xff]
      %v832 = vld [vmem:[#allocation3 + $0x70] sm:$0xff]
      %v833 = vld [vmem:[#allocation3 + $0x78] sm:$0xff]
      %v834 = vld [vmem:[#allocation3 + $0x80] sm:$0xff]
      %v835 = vld [vmem:[#allocation3 + $0x88] sm:$0xff]
      %v836 = vld [vmem:[#allocation3 + $0x90] sm:$0xff]
      %v837 = vld [vmem:[#allocation3 + $0x98] sm:$0xff]
      %v838 = vld [vmem:[#allocation3 + $0xa0] sm:$0xff]
      %v839 = vld [vmem:[#allocation3 + $0xa8] sm:$0xff]
      %v840 = vld [vmem:[#allocation3 + $0xb0] sm:$0xff]
      %v841 = vld [vmem:[#allocation3 + $0xb8] sm:$0xff]
      %v842 = vld [vmem:[#allocation3 + $0xc0] sm:$0xff]
      %v843 = vld [vmem:[#allocation3 + $0xc8] sm:$0xff]
      %v844 = vld [vmem:[#allocation3 + $0xd0] sm:$0xff]
      %v845 = vld [vmem:[#allocation3 + $0xd8] sm:$0xff]
      %v846 = vld [vmem:[#allocation3 + $0xe0] sm:$0xff]
      %v847 = vld [vmem:[#allocation3 + $0xe8] sm:$0xff]
      %v848 = vld [vmem:[#allocation3 + $0xf0] sm:$0xff]
      %v849 = vld [vmem:[#allocation3 + $0xf8] sm:$0xff]
      %v850 = vld [vmem:[#allocation3 + $0x100] sm:$0xff]
      %v851 = vld [vmem:[#allocation3 + $0x108] sm:$0xff]
      %v852 = vld [vmem:[#allocation3 + $0x110] sm:$0xff]
      %v853 = vld [vmem:[#allocation3 + $0x118] sm:$0xff]
      %v854 = vpack.c.bf16 %v820, %v818
      %v855 = vpack.c.bf16 %v821, %v819
      %v856 = vpack.c.bf16 %v824, %v822
      %v857 = vpack.c.bf16 %v825, %v823
      %v858 = vpack.c.bf16 %v828, %v826
      %v859 = vpack.c.bf16 %v829, %v827
      %v860 = vpack.c.bf16 %v832, %v830
      %v861 = vpack.c.bf16 %v833, %v831
      %v862 = vpack.c.bf16 %v836, %v834
      %v863 = vpack.c.bf16 %v837, %v835
      %v864 = vpack.c.bf16 %v840, %v838
      %v865 = vpack.c.bf16 %v841, %v839
      %v866 = vpack.c.bf16 %v844, %v842
      %v867 = vpack.c.bf16 %v845, %v843
      %v868 = vpack.c.bf16 %v848, %v846
      %v869 = vpack.c.bf16 %v849, %v847
      %v870 = vpack.c.bf16 %v852, %v850
      %v871 = vpack.c.bf16 %v853, %v851
      %v872 = vld [vmem:[%s4] sm:$0xff]
      %v873 = vld [vmem:[%s5] sm:$0xff]
      %875 = vset.pattern.permute.xlu0 0
      %876 = vperm.xlu0 %875, %v873
      %v877 = vpop.permute.xlu0 %876
      %v880 = vunpack.c.l.b16 %v872
      %v881 = vunpack.c.h.b16 %v872
      %v882 = vpack.c.b16 %v880, %v880
      %v883 = vpack.c.b16 %v881, %v881
      %vm885 = vcmask 130048
      %v887 = vsel %vm885, %v883, 0
      %889 = vmatprep.subr.bf16.mxu0 %v855
      %890 = vmatpush1.bf16.msra.mxu0 %v854
      %891 = vmatprep.subr.bf16.mxu0 %v857
      %892 = vmatpush1.bf16.msra.mxu0 %v856
      %893 = vmatprep.subr.bf16.mxu0 %v859
      %894 = vmatpush1.bf16.msra.mxu0 %v858
      %895 = vmatprep.subr.bf16.mxu0 %v861
      %896 = vmatpush1.bf16.msra.mxu0 %v860
      %897 = vmatprep.subr.bf16.mxu0 %v863
      %898 = vmatpush1.bf16.msra.mxu0 %v862
      %899 = vmatprep.subr.bf16.mxu0 %v865
      %900 = vmatpush1.bf16.msra.mxu0 %v864
      %901 = vmatprep.subr.bf16.mxu0 %v867
      %902 = vmatpush1.bf16.msra.mxu0 %v866
      %903 = vmatprep.subr.bf16.mxu0 %v869
      %904 = vmatpush1.bf16.msra.mxu0 %v868
      %905 = vmatprep.subr.bf16.mxu0 %v871
      %906 = vmatpush1.bf16.msra.mxu0 %v870
      %907 = vmatprep.subr.bf16.mxu0 0
      %908 = vmatpush1.bf16.msra.mxu0 0
      %909 = vmatprep.subr.bf16.mxu0 0
      %910 = vmatpush1.bf16.msra.mxu0 0
      %911 = vmatprep.subr.bf16.mxu0 0
      %912 = vmatpush1.bf16.msra.mxu0 0
      %913 = vmatprep.subr.bf16.mxu0 0
      %914 = vmatpush1.bf16.msra.mxu0 0
      %915 = vmatprep.subr.bf16.mxu0 0
      %916 = vmatpush1.bf16.msra.mxu0 0
      %917 = vmatprep.subr.bf16.mxu0 0
      %918 = vmatpush1.bf16.msra.mxu0 0
      %919 = vmatprep.subr.bf16.mxu0 0
      %920 = vmatpush1.bf16.msra.mxu0 0
      %921 = vmatprep.mubr.bf16.mxu0 %v887
      %922 = vmatmul.mubr.bf16.gmra.mrb[0].mxu0 %v882
      %v923 = vpop.f32.mrb[0].mxu0
      %v924 = vadd.f32 %v877, %v923
      %v925 = vpop.f32.mrb[0].mxu0
      %v926 = vadd.f32 %v877, %v925
      %v927 = vpop.f32.mrb[0].mxu0
      %v928 = vpop.f32.mrb[0].mxu0
      %929 = vdwg.mxu0
      %vm930 = vcmp.gt.f32.partialorder %v924, 0.0
      %vm931 = vcmp.gt.f32.partialorder %v926, 0.0
      %v932 = vmul.f32 %v924, 0.01
      %v933 = vmul.f32 %v926, 0.01
      %v934 = vsel %vm930, %v924, %v932
      %v935 = vsel %vm931, %v926, %v933
      %936 = vrot.lane.b32.xlu0 %v934, 17
      %v937 = vpop.permute.xlu0 %936
      %938 = vrot.lane.b32.xlu0 %v935, 17
      %v939 = vpop.permute.xlu0 %938
      %v940 = vsel %vm334, %v937, %v939
      %v941 = vsel %vm334, %v939, %v937
      %v942 = vmul.f32 %v941, %v341
      %v943 = vmul.f32 %v940, %v345
      %944 = vst [vmem:[#allocation4] sm:$0xff] %v942
      %945 = vst [vmem:[#allocation4 + $0x8] sm:$0xff] %v943
      %946 = vrot.lane.b32.xlu0 %v934, 16
      %v947 = vpop.permute.xlu0 %946
      %948 = vrot.lane.b32.xlu0 %v935, 16
      %v949 = vpop.permute.xlu0 %948
      %v950 = vsel %vm356, %v947, %v949
      %v951 = vsel %vm356, %v949, %v947
      %v952 = vmul.f32 %v951, %v363
      %v953 = vmul.f32 %v950, %v367
      %954 = vst [vmem:[#allocation4 + $0x10] sm:$0xff] %v952
      %955 = vst [vmem:[#allocation4 + $0x18] sm:$0xff] %v953
      %956 = vrot.lane.b32.xlu0 %v934, 15
      %v957 = vpop.permute.xlu0 %956
      %958 = vrot.lane.b32.xlu0 %v935, 15
      %v959 = vpop.permute.xlu0 %958
      %v960 = vsel %vm384, %v957, %v959
      %v961 = vsel %vm384, %v959, %v957
      %v962 = vmul.f32 %v961, %v391
      %v963 = vmul.f32 %v960, %v395
      %964 = vst [vmem:[#allocation4 + $0x20] sm:$0xff] %v962
      %965 = vst [vmem:[#allocation4 + $0x28] sm:$0xff] %v963
      %966 = vrot.lane.b32.xlu0 %v934, 1
      %v967 = vpop.permute.xlu0 %966
      %968 = vrot.lane.b32.xlu0 %v935, 1
      %v969 = vpop.permute.xlu0 %968
      %v970 = vsel %vm406, %v967, %v969
      %v971 = vsel %vm406, %v969, %v967
      %v972 = vmul.f32 %v971, %v413
      %v973 = vmul.f32 %v970, %v417
      %974 = vst [vmem:[#allocation4 + $0x30] sm:$0xff] %v972
      %975 = vst [vmem:[#allocation4 + $0x38] sm:$0xff] %v973
      %v976 = vmul.f32 %v934, %v434
      %v977 = vmul.f32 %v935, %v438
      %978 = vst [vmem:[#allocation4 + $0x40] sm:$0xff] %v976
      %979 = vst [vmem:[#allocation4 + $0x48] sm:$0xff] %v977
      %980 = vrot.lane.b32.xlu0 %v934, 127
      %v981 = vpop.permute.xlu0 %980
      %982 = vrot.lane.b32.xlu0 %v935, 127
      %v983 = vpop.permute.xlu0 %982
      %v984 = vsel %vm451, %v981, %v983
      %v985 = vsel %vm451, %v983, %v981
      %v986 = vmul.f32 %v984, %v458
      %v987 = vmul.f32 %v985, %v462
      %988 = vst [vmem:[#allocation4 + $0x50] sm:$0xff] %v986
      %989 = vst [vmem:[#allocation4 + $0x58] sm:$0xff] %v987
      %990 = vrot.lane.b32.xlu0 %v934, 113
      %v991 = vpop.permute.xlu0 %990
      %992 = vrot.lane.b32.xlu0 %v935, 113
      %v993 = vpop.permute.xlu0 %992
      %v994 = vsel %vm479, %v991, %v993
      %v995 = vsel %vm479, %v993, %v991
      %v996 = vmul.f32 %v994, %v486
      %v997 = vmul.f32 %v995, %v490
      %998 = vst [vmem:[#allocation4 + $0x60] sm:$0xff] %v996
      %999 = vst [vmem:[#allocation4 + $0x68] sm:$0xff] %v997
      %1000 = vrot.lane.b32.xlu0 %v934, 112
      %v1001 = vpop.permute.xlu0 %1000
      %1002 = vrot.lane.b32.xlu0 %v935, 112
      %v1003 = vpop.permute.xlu0 %1002
      %v1004 = vsel %vm501, %v1001, %v1003
      %v1005 = vsel %vm501, %v1003, %v1001
      %v1006 = vmul.f32 %v1004, %v508
      %v1007 = vmul.f32 %v1005, %v512
      %1008 = vst [vmem:[#allocation4 + $0x70] sm:$0xff] %v1006
      %1009 = vst [vmem:[#allocation4 + $0x78] sm:$0xff] %v1007
      %1010 = vrot.lane.b32.xlu0 %v934, 111
      %v1011 = vpop.permute.xlu0 %1010
      %1012 = vrot.lane.b32.xlu0 %v935, 111
      %v1013 = vpop.permute.xlu0 %1012
      %v1014 = vsel %vm529, %v1011, %v1013
      %v1015 = vsel %vm529, %v1013, %v1011
      %v1016 = vmul.f32 %v1014, %v536
      %v1017 = vmul.f32 %v1015, %v540
      %1018 = vst [vmem:[#allocation4 + $0x80] sm:$0xff] %v1016
      %1019 = vst [vmem:[#allocation4 + $0x88] sm:$0xff] %v1017
      %v1020 = vld [vmem:[#allocation4] sm:$0xff]
      %v1021 = vld [vmem:[#allocation4 + $0x8] sm:$0xff]
      %v1022 = vld [vmem:[#allocation4 + $0x10] sm:$0xff]
      %v1023 = vld [vmem:[#allocation4 + $0x18] sm:$0xff]
      %v1024 = vld [vmem:[#allocation4 + $0x20] sm:$0xff]
      %v1025 = vld [vmem:[#allocation4 + $0x28] sm:$0xff]
      %v1026 = vld [vmem:[#allocation4 + $0x30] sm:$0xff]
      %v1027 = vld [vmem:[#allocation4 + $0x38] sm:$0xff]
      %v1028 = vld [vmem:[#allocation4 + $0x40] sm:$0xff]
      %v1029 = vld [vmem:[#allocation4 + $0x48] sm:$0xff]
      %v1030 = vld [vmem:[#allocation4 + $0x50] sm:$0xff]
      %v1031 = vld [vmem:[#allocation4 + $0x58] sm:$0xff]
      %v1032 = vld [vmem:[#allocation4 + $0x60] sm:$0xff]
      %v1033 = vld [vmem:[#allocation4 + $0x68] sm:$0xff]
      %v1034 = vld [vmem:[#allocation4 + $0x70] sm:$0xff]
      %v1035 = vld [vmem:[#allocation4 + $0x78] sm:$0xff]
      %v1036 = vld [vmem:[#allocation4 + $0x80] sm:$0xff]
      %v1037 = vld [vmem:[#allocation4 + $0x88] sm:$0xff]
      %v1038 = vpack.c.bf16 %v1022, %v1020
      %v1039 = vpack.c.bf16 %v1023, %v1021
      %v1040 = vpack.c.bf16 %v1026, %v1024
      %v1041 = vpack.c.bf16 %v1027, %v1025
      %v1042 = vpack.c.bf16 %v1030, %v1028
      %v1043 = vpack.c.bf16 %v1031, %v1029
      %v1044 = vpack.c.bf16 %v1034, %v1032
      %v1045 = vpack.c.bf16 %v1035, %v1033
      %v1046 = vpack.c.bf16 %v1036, %v1036
      %v1047 = vpack.c.bf16 %v1037, %v1037
      %v1048 = vld [vmem:[%s6] sm:$0xf]
      %v1049 = vld [vmem:[%s6 + $0x4] sm:$0xf]
      %v1050 = vld [vmem:[%s7] sm:$0xff]
      %v1051 = vld [vmem:[%s7 + $0x8] sm:$0xff]
      %1053 = vset.pattern.permute.xlu0 0
      %1054 = vperm.xlu0 %1053, %v1050
      %v1055 = vpop.permute.xlu0 %1054
      %1058 = vset.pattern.permute.xlu0 0
      %1059 = vperm.xlu0 %1058, %v1051
      %v1060 = vpop.permute.xlu0 %1059
      %v1064 = vunpack.c.l.b16 %v1048
      %v1065 = vunpack.c.l.b16 %v1049
      %v1066 = vpack.c.b16 %v1065, %v1064
      %vm1067 = vcmask 588800
      %v1069 = vsel %vm1067, %v1066, 0
      %vm1071 = vcmask 1043456
      %v1073 = vsel %vm1071, %v1046, 0
      %v1076 = vsel %vm1071, %v1047, 0
      %1078 = vmatprep.subr.bf16.mxu0 %v1039
      %1079 = vmatpush1.bf16.msra.mxu0 %v1038
      %1080 = vmatprep.subr.bf16.mxu0 %v1041
      %1081 = vmatpush1.bf16.msra.mxu0 %v1040
      %1082 = vmatprep.subr.bf16.mxu0 %v1043
      %1083 = vmatpush1.bf16.msra.mxu0 %v1042
      %1084 = vmatprep.subr.bf16.mxu0 %v1045
      %1085 = vmatpush1.bf16.msra.mxu0 %v1044
      %1086 = vmatprep.subr.bf16.mxu0 %v1076
      %1087 = vmatpush1.bf16.msra.mxu0 %v1073
      %1088 = vmatprep.subr.bf16.mxu0 0
      %1089 = vmatpush1.bf16.msra.mxu0 0
      %1090 = vmatprep.subr.bf16.mxu0 0
      %1091 = vmatpush1.bf16.msra.mxu0 0
      %1092 = vmatprep.subr.bf16.mxu0 0
      %1093 = vmatpush1.bf16.msra.mxu0 0
      %1094 = vmatprep.subr.bf16.mxu0 0
      %1095 = vmatpush1.bf16.msra.mxu0 0
      %1096 = vmatprep.subr.bf16.mxu0 0
      %1097 = vmatpush1.bf16.msra.mxu0 0
      %1098 = vmatprep.subr.bf16.mxu0 0
      %1099 = vmatpush1.bf16.msra.mxu0 0
      %1100 = vmatprep.subr.bf16.mxu0 0
      %1101 = vmatpush1.bf16.msra.mxu0 0
      %1102 = vmatprep.subr.bf16.mxu0 0
      %1103 = vmatpush1.bf16.msra.mxu0 0
      %1104 = vmatprep.subr.bf16.mxu0 0
      %1105 = vmatpush1.bf16.msra.mxu0 0
      %1106 = vmatprep.subr.bf16.mxu0 0
      %1107 = vmatpush1.bf16.msra.mxu0 0
      %1108 = vmatprep.subr.bf16.mxu0 0
      %1109 = vmatpush1.bf16.msra.mxu0 0
      %1110 = vmatprep.mubr.bf16.mxu0 0
      %1111 = vmatmul.mubr.bf16.gmra.mrb[0].mxu0 %v1069
      %v1112 = vpop.f32.mrb[0].mxu0
      %v1113 = vadd.f32 %v1055, %v1112
      %v1114 = vpop.f32.mrb[0].mxu0
      %v1115 = vadd.f32 %v1055, %v1114
      %v1116 = vpop.f32.mrb[0].mxu0
      %v1117 = vadd.f32 %v1060, %v1116
      %v1118 = vpop.f32.mrb[0].mxu0
      %v1119 = vadd.f32 %v1060, %v1118
      %1120 = vdwg.mxu0
      %vm1121 = vcmp.gt.f32.partialorder %v1113, 0.0
      %vm1122 = vcmp.gt.f32.partialorder %v1115, 0.0
      %vm1123 = vcmp.gt.f32.partialorder %v1117, 0.0
      %vm1124 = vcmp.gt.f32.partialorder %v1119, 0.0
      %v1125 = vmul.f32 %v1113, 0.01
      %v1126 = vmul.f32 %v1115, 0.01
      %v1127 = vmul.f32 %v1117, 0.01
      %v1128 = vmul.f32 %v1119, 0.01
      %v1129 = vsel %vm1121, %v1113, %v1125
      %v1130 = vsel %vm1122, %v1115, %v1126
      %v1131 = vsel %vm1123, %v1117, %v1127
      %v1132 = vsel %vm1124, %v1119, %v1128
      %v1133 = vadd.f32 %v1129, %v644
      %v1134 = vadd.f32 %v1130, %v645
      %v1135 = vadd.f32 %v1131, %v646
      %v1136 = vadd.f32 %v1132, %v647
      %1137 = vst [vmem:[%s305] sm:$0xff] %v1133
      %1138 = vst [vmem:[%s305 + $0x8] sm:$0xff] %v1134
      %1139 = vst [vmem:[%s305 + $0x10] sm:$0xff] %v1135
      %1140 = vst [vmem:[%s305 + $0x18] sm:$0xff] %v1136
      %p1141 = scmp.lt.s32.totalorder %s19, 1
      %s1142 = scalar_select %p1141, %s19, 1
      %s1143 = smul.addr %s1142, 4
      %s1144 = smul.addr %s1143, 8
      %s1145 = scalar_lea.vmem %s8, %s1144
      // Predicated region
      $region53: #{res_conv_forward.1} parent=51 // pred_check
        %p1146 = pneg %p210
      $region54: #{res_conv_forward.1} parent=51 // pred_check_branch
        %1148 = sbr.rel (%p1146) target = $region56
      $region55: #{res_conv_forward.1} parent=51 // pred_region
        _
      $region56: #{res_conv_forward.1} parent=51 // pred_fallthru
        _
    $region52: #{res_conv_forward.1} parent=5 // pred_fallthru
      _
    %p1149 = scmp.le.s32.totalorder 2, %s14
    // Predicated region
    $region57: #{res_conv_forward.1} parent=5 // pred_check
      %p1150 = pneg %p1149
    $region58: #{res_conv_forward.1} parent=5 // pred_check_branch
      %1152 = sbr.rel (%p1150) target = $region60
    $region59: #{res_conv_forward.1} parent=5 // pred_region
      %s1153 = ssub.s32 %s14, 2
      // Predicated region
      $region61: #{res_conv_forward.1} parent=59 // pred_check
        %p1154 = pneg %p216
      $region62: #{res_conv_forward.1} parent=59 // pred_check_branch
        %1156 = sbr.rel (%p1154) target = $region64
      $region63: #{res_conv_forward.1} parent=59 // pred_region
        %p1157 = scmp.lt.s32.totalorder %s20, 1
        %s1158 = scalar_select %p1157, %s20, 1
        %s1159 = smul.addr %s1158, 4
        %s1160 = smul.addr %s1159, 8
        %s1161 = scalar_lea.vmem %s8, %s1160
      $region64: #{res_conv_forward.1} parent=59 // pred_fallthru
        _
    $region60: #{res_conv_forward.1} parent=5 // pred_fallthru
      _
  $region6: #{res_conv_forward.1} parent=0 // loop_footer
    %s18 = sadd.s32 1, %s14
  $region7: #{res_conv_forward.1} parent=0 // loop_footer_branch
    %13 = sbr.rel target = $region3
  $region8: #{res_conv_forward.1} parent=0 // loop_exit
    _

</llo_original>
